<compile_context>
chip_gen: v7x
topology: tpu7x:2x2x1
jax: 0.10.0
libtpu: 0.0.40
codegen_flags: <defaults>
</compile_context>

<pallas_src>
import jax
import jax.numpy as jnp
from jax import lax
from jax.experimental import pallas as pl
from jax.experimental.pallas import tpu as pltpu


PT = 8  # top pad (in sublanes) inside the scratch -> interior stores stay tile-aligned


def decoder_block_kernel(x_ref, m1_ref, b1_ref, m2_ref, b2_ref, o_ref,
                         xpad_ref, ypad_ref):
    """Fused ConvRelu(3x3) -> ConvTranspose2d(4, stride=2, pad=1) -> ReLU, one batch element.

    x_ref   : (1, H, W*Cin)                lane-dense NHWC input rows
    m1_ref  : (3, W*Cin,  W*Cmid)          banded conv3x3 weights, one matrix per H-tap
    b1_ref  : (1, W*Cmid)                  conv3x3 bias, tiled over W
    m2_ref  : (3, W*Cmid, W*4*Cout)        banded deconv weights (parity-packed columns)
    b2_ref  : (1, W*4*Cout)                deconv bias, tiled over (W, 2, 2)
    o_ref   : (1, H, W*4*Cout)             parity-packed, lane-dense output
    xpad_ref: (PT+H+1, W*Cin)   VMEM       H-padded input scratch  (halo rows PT-1, PT+H)
    ypad_ref: (PT+H+1, W*Cmid)  VMEM       H-padded intermediate   (never hits HBM)
    """
    _, H, WCin = x_ref.shape
    WCmid = ypad_ref.shape[1]

    # Zero ONLY the halo rows (interior rows are fully overwritten each step).
    # Re-done every step - it is a few hundred bytes - so correctness does not
    # depend on which core executed grid step 0.
    xpad_ref[PT - 1:PT, :] = jnp.zeros((1, WCin), jnp.float32)
    xpad_ref[PT + H:PT + H + 1, :] = jnp.zeros((1, WCin), jnp.float32)
    ypad_ref[PT - 1:PT, :] = jnp.zeros((1, WCmid), jnp.float32)
    ypad_ref[PT + H:PT + H + 1, :] = jnp.zeros((1, WCmid), jnp.float32)

    # In-kernel H zero-padding of x (W padding is folded into the banded weights).
    xpad_ref[PT:PT + H, :] = x_ref[0]

    # ---- 3x3 conv + bias + ReLU: 3 lane-dense matmuls (one per H-tap) -------
    acc1 = jnp.dot(xpad_ref[PT - 1:PT - 1 + H, :], m1_ref[0],
                   preferred_element_type=jnp.float32)
    acc1 = acc1 + jnp.dot(xpad_ref[PT:PT + H, :], m1_ref[1],
                          preferred_element_type=jnp.float32)
    acc1 = acc1 + jnp.dot(xpad_ref[PT + 1:PT + 1 + H, :], m1_ref[2],
                          preferred_element_type=jnp.float32)
    y = jnp.maximum(acc1 + b1_ref[...], 0.0)          # (H, W*Cmid)

    # ---- keep intermediate in VMEM (fusion: no HBM round trip for y) --------
    ypad_ref[PT:PT + H, :] = y

    # ---- 4x4 / stride-2 / pad-1 transposed conv + bias + ReLU ---------------
    # All 4 output parity planes come out of the same matmuls via parity-packed
    # weight columns (lane index = ((i*2 + p)*2 + q)*Cout + c).
    acc2 = jnp.dot(ypad_ref[PT - 1:PT - 1 + H, :], m2_ref[0],
                   preferred_element_type=jnp.float32)
    acc2 = acc2 + jnp.dot(ypad_ref[PT:PT + H, :], m2_ref[1],
                          preferred_element_type=jnp.float32)
    acc2 = acc2 + jnp.dot(ypad_ref[PT + 1:PT + 1 + H, :], m2_ref[2],
                          preferred_element_type=jnp.float32)
    o_ref[0] = jnp.maximum(acc2 + b2_ref[...], 0.0)   # (H, W*4*Cout) lane-dense store


# --------------------------------- Wrapper ------------------------------------
def decoder_block_v2(x_nchw, w1_t, b1, w2_t, b2):
    """DecoderBlockV2 forward (is_deconv=True). x_nchw: (N, Cin, H, W) float32.
    w1_t: (Cmid, Cin, 3, 3), b1: (Cmid,), w2_t: (Cmid, Cout, 4, 4), b2: (Cout,)
    (PyTorch parameter layouts). Returns (N, Cout, 2H, 2W)."""
    N, Cin, H, W = x_nchw.shape
    Cmid = w1_t.shape[0]
    Cout = w2_t.shape[1]
    f32 = jnp.float32

    # NCHW -> lane-dense (N, H, W*Cin) rows (w-major, cin-minor in lanes).
    x = jnp.transpose(x_nchw, (0, 2, 3, 1)).reshape(N, H, W * Cin).astype(f32)

    # Banded selection tensor S[w', k, w] = 1 iff w' - w + 1 == k  (k = W-tap index).
    wp = jnp.arange(W)
    S = (wp[:, None, None] - wp[None, None, :] + 1
         == jnp.arange(3)[None, :, None]).astype(f32)          # (W, 3, W)

    # Conv1 banded weights: M1[t, w'*Cin+cin, w*Cmid+cm] = W1[cm,cin,kh=t,kw=w'-w+1]
    # (zero outside the 3-wide band -> W zero-padding is built in).
    w1d = jnp.transpose(w1_t, (2, 3, 1, 0)).astype(f32)        # (kh, kw, Cin, Cmid)
    m1 = jnp.einsum('akw,tkcm->tacwm', S, w1d,
                    precision=lax.Precision.HIGHEST).reshape(3, W * Cin, W * Cmid)
    b1_row = jnp.tile(b1.astype(f32), W).reshape(1, W * Cmid)

    # Deconv: output pixel (2j+p, 2i+q) draws from y rows ih=j+t-1 (t in 0..2) with
    # kh = p+3-2t, and from y cols iw=i+s-1 (s in 0..2) with kw = q+3-2s (valid taps only).
    w2d = jnp.zeros((3, 3, 2, 2, Cmid, Cout), f32)
    for t in range(3):
        for s in range(3):
            for p in range(2):
                for q in range(2):
                    kh = p + 3 - 2 * t
                    kw = q + 3 - 2 * s
                    if 0 <= kh <= 3 and 0 <= kw <= 3:
                        w2d = w2d.at[t, s, p, q].set(w2_t[:, :, kh, kw].astype(f32))
    # M2[t, iw*Cmid+ci, ((i*2+p)*2+q)*Cout+co]
    m2 = jnp.einsum('asi,tspqcd->tacipqd', S, w2d,
                    precision=lax.Precision.HIGHEST).reshape(3, W * Cmid, W * 4 * Cout)
    b2_row = jnp.tile(b2.astype(f32), 4 * W).reshape(1, W * 4 * Cout)

    # Advisory scheduling hint (actual MXU flops of the 6 banded matmuls).
    flops = 2 * N * 3 * H * (W * Cin * W * Cmid + W * Cmid * W * 4 * Cout)
    bytes_accessed = 4 * (x.size + N * H * W * 4 * Cout + m1.size + m2.size
                          + b1_row.size + b2_row.size)

    out_packed = pl.pallas_call(
        decoder_block_kernel,
        out_shape=jax.ShapeDtypeStruct((N, H, W * 4 * Cout), f32),
        grid_spec=pltpu.PrefetchScalarGridSpec(
            num_scalar_prefetch=0,
            grid=(N,),
            in_specs=[
                pl.BlockSpec((1, H, W * Cin), lambda n: (n, 0, 0)),
                pl.BlockSpec((3, W * Cin, W * Cmid), lambda n: (0, 0, 0)),
                pl.BlockSpec((1, W * Cmid), lambda n: (0, 0)),
                pl.BlockSpec((3, W * Cmid, W * 4 * Cout), lambda n: (0, 0, 0)),
                pl.BlockSpec((1, W * 4 * Cout), lambda n: (0, 0)),
            ],
            out_specs=pl.BlockSpec((1, H, W * 4 * Cout), lambda n: (n, 0, 0)),
            scratch_shapes=[
                pltpu.VMEM((PT + H + 1, W * Cin), f32),
                pltpu.VMEM((PT + H + 1, W * Cmid), f32),
            ],
        ),
        compiler_params=pltpu.CompilerParams(
            dimension_semantics=("parallel",),
            vmem_limit_bytes=32 * 1024 * 1024,
        ),
        cost_estimate=pl.CostEstimate(
            flops=flops, transcendentals=0, bytes_accessed=bytes_accessed),
    )(x, m1, b1_row, m2, b2_row)

    # Un-interleave parity planes: (N, H, W*4*Cout) -> (N, Cout, 2H, 2W).
    out = out_packed.reshape(N, H, W, 2, 2, Cout)      # (n, j, i, p, q, c)
    out = jnp.transpose(out, (0, 5, 1, 3, 2, 4))       # (n, c, j, p, i, q)
    return out.reshape(N, Cout, 2 * H, 2 * W)


# ------------------------- Pure-JAX reference ---------------------------------
def decoder_block_v2_ref(x_nchw, w1_t, b1, w2_t, b2):
    y = lax.conv_general_dilated(
        x_nchw, w1_t, window_strides=(1, 1), padding=((1, 1), (1, 1)),
        dimension_numbers=("NCHW", "OIHW", "NCHW"), precision=lax.Precision.HIGHEST)
    y = jnp.maximum(y + b1[None, :, None, None], 0.0)
    # transposed conv == input-dilated conv with spatially-flipped, transposed kernel
    w2_conv = jnp.flip(w2_t, axis=(2, 3)).transpose(1, 0, 2, 3)  # (Cout, Cmid, 4, 4)
    z = lax.conv_general_dilated(
        y, w2_conv, window_strides=(1, 1), padding=((2, 2), (2, 2)),
        lhs_dilation=(2, 2), dimension_numbers=("NCHW", "OIHW", "NCHW"),
        precision=lax.Precision.HIGHEST)
    return jnp.maximum(z + b2[None, :, None, None], 0.0)


if __name__ == "__main__":
    N, Cin, Cmid, Cout, H, W = 2, 4, 8, 4, 16, 16

    key = jax.random.PRNGKey(0)
    kx, k1, k2, k3, k4 = jax.random.split(key, 5)
    x = jax.random.normal(kx, (N, Cin, H, W), dtype=jnp.float32)
    # Deterministic synthetic parameters (PyTorch layouts).
    w1_t = 0.1 * jax.random.normal(k1, (Cmid, Cin, 3, 3), dtype=jnp.float32)
    b1 = 0.1 * jax.random.normal(k2, (Cmid,), dtype=jnp.float32)
    w2_t = 0.1 * jax.random.normal(k3, (Cmid, Cout, 4, 4), dtype=jnp.float32)
    b2 = 0.1 * jax.random.normal(k4, (Cout,), dtype=jnp.float32)

    out = jax.block_until_ready(jax.jit(decoder_block_v2)(x, w1_t, b1, w2_t, b2))
    ref = jax.block_until_ready(decoder_block_v2_ref(x, w1_t, b1, w2_t, b2))

    assert out.shape == (N, Cout, 2 * H, 2 * W), out.shape
    # Kernel uses default MXU precision (bf16 operand rounding, f32 accumulation);
    # reference is full-f32 HIGHEST, hence the widened tolerance.
    max_err = float(jnp.abs(out - ref).max())
    assert jnp.allclose(out, ref, atol=3e-2, rtol=3e-2), max_err

    print("KERNEL_OK")
</pallas_src>

<mosaic_0001>
module attributes {stable_mosaic.version = 11 : i64} {
  func.func @decoder_block_kernel(%arg0: i32, %arg1: memref<1x16x64xf32, #tpu.memory_space<vmem>>, %arg2: memref<3x64x128xf32, #tpu.memory_space<vmem>>, %arg3: memref<1x128xf32, #tpu.memory_space<vmem>>, %arg4: memref<3x128x256xf32, #tpu.memory_space<vmem>>, %arg5: memref<1x256xf32, #tpu.memory_space<vmem>>, %arg6: memref<1x16x256xf32, #tpu.memory_space<vmem>>, %arg7: memref<25x64xf32, #tpu.memory_space<vmem>>, %arg8: memref<25x128xf32, #tpu.memory_space<vmem>>) attributes {dimension_semantics = [#tpu.dimension_semantics<parallel>], iteration_bounds = array<i64: 2>, scalar_prefetch = 0 : i64, scratch_operands = 2 : i64, tpu.core_type = #tpu.core_type<tc>, window_params = [{transform_indices = @transform_0, window_bounds = array<i64: 1, 16, 64>}, {pipeline_mode = #tpu.pipeline_mode<synchronous>, transform_indices = @transform_1, window_bounds = array<i64: 3, 64, 128>}, {pipeline_mode = #tpu.pipeline_mode<synchronous>, transform_indices = @transform_2, window_bounds = array<i64: 1, 128>}, {pipeline_mode = #tpu.pipeline_mode<synchronous>, transform_indices = @transform_3, window_bounds = array<i64: 3, 128, 256>}, {pipeline_mode = #tpu.pipeline_mode<synchronous>, transform_indices = @transform_4, window_bounds = array<i64: 1, 256>}, {transform_indices = @transform_5, window_bounds = array<i64: 1, 16, 256>}]} {
    %cst = arith.constant 0.000000e+00 : f32
    %0 = vector.broadcast %cst : f32 to vector<1x64xf32>
    %c7 = arith.constant 7 : index
    %c0 = arith.constant 0 : index
    %1 = vector.load %arg7[%c7, %c0] : memref<25x64xf32, #tpu.memory_space<vmem>>, vector<1x64xf32>
    tpu.vector_store %arg7[%c7, %c0], %0 {strides = array<i32>} : memref<25x64xf32, #tpu.memory_space<vmem>>, vector<1x64xf32>,
    %cst_0 = arith.constant 0.000000e+00 : f32
    %2 = vector.broadcast %cst_0 : f32 to vector<1x64xf32>
    %c24 = arith.constant 24 : index
    %c0_1 = arith.constant 0 : index
    %3 = vector.load %arg7[%c24, %c0_1] : memref<25x64xf32, #tpu.memory_space<vmem>>, vector<1x64xf32>
    tpu.vector_store %arg7[%c24, %c0_1], %2 {strides = array<i32>} : memref<25x64xf32, #tpu.memory_space<vmem>>, vector<1x64xf32>,
    %cst_2 = arith.constant 0.000000e+00 : f32
    %4 = vector.broadcast %cst_2 : f32 to vector<1x128xf32>
    %c7_3 = arith.constant 7 : index
    %c0_4 = arith.constant 0 : index
    %5 = vector.load %arg8[%c7_3, %c0_4] : memref<25x128xf32, #tpu.memory_space<vmem>>, vector<1x128xf32>
    tpu.vector_store %arg8[%c7_3, %c0_4], %4 {strides = array<i32>} : memref<25x128xf32, #tpu.memory_space<vmem>>, vector<1x128xf32>,
    %cst_5 = arith.constant 0.000000e+00 : f32
    %6 = vector.broadcast %cst_5 : f32 to vector<1x128xf32>
    %c24_6 = arith.constant 24 : index
    %c0_7 = arith.constant 0 : index
    %7 = vector.load %arg8[%c24_6, %c0_7] : memref<25x128xf32, #tpu.memory_space<vmem>>, vector<1x128xf32>
    tpu.vector_store %arg8[%c24_6, %c0_7], %6 {strides = array<i32>} : memref<25x128xf32, #tpu.memory_space<vmem>>, vector<1x128xf32>,
    %c0_8 = arith.constant 0 : index
    %c0_9 = arith.constant 0 : index
    %c0_10 = arith.constant 0 : index
    %8 = vector.load %arg1[%c0_8, %c0_9, %c0_10] : memref<1x16x64xf32, #tpu.memory_space<vmem>>, vector<1x16x64xf32>
    %9 = vector.shape_cast %8 : vector<1x16x64xf32> to vector<16x64xf32>
    %c8 = arith.constant 8 : index
    %c0_11 = arith.constant 0 : index
    %10 = vector.load %arg7[%c8, %c0_11] : memref<25x64xf32, #tpu.memory_space<vmem>>, vector<16x64xf32>
    tpu.vector_store %arg7[%c8, %c0_11], %9 {strides = array<i32>} : memref<25x64xf32, #tpu.memory_space<vmem>>, vector<16x64xf32>,
    %c7_12 = arith.constant 7 : index
    %c0_13 = arith.constant 0 : index
    %11 = vector.load %arg7[%c7_12, %c0_13] : memref<25x64xf32, #tpu.memory_space<vmem>>, vector<16x64xf32>
    %c0_14 = arith.constant 0 : index
    %c0_15 = arith.constant 0 : index
    %c0_16 = arith.constant 0 : index
    %12 = vector.load %arg2[%c0_14, %c0_15, %c0_16] : memref<3x64x128xf32, #tpu.memory_space<vmem>>, vector<1x64x128xf32>
    %13 = vector.shape_cast %12 : vector<1x64x128xf32> to vector<64x128xf32>
    %cst_17 = arith.constant dense<0.000000e+00> : vector<16x128xf32>
    %14 = tpu.matmul %11, %13, %cst_17 {dimension_numbers = #tpu.dot_dimension_numbers<[1], [0], [0], [1], [0, 0, 1, 1], [], []>} : vector<16x64xf32>, vector<64x128xf32>, vector<16x128xf32> -> vector<16x128xf32>
    %c8_18 = arith.constant 8 : index
    %c0_19 = arith.constant 0 : index
    %15 = vector.load %arg7[%c8_18, %c0_19] : memref<25x64xf32, #tpu.memory_space<vmem>>, vector<16x64xf32>
    %c1 = arith.constant 1 : index
    %c0_20 = arith.constant 0 : index
    %c0_21 = arith.constant 0 : index
    %16 = vector.load %arg2[%c1, %c0_20, %c0_21] : memref<3x64x128xf32, #tpu.memory_space<vmem>>, vector<1x64x128xf32>
    %17 = vector.shape_cast %16 : vector<1x64x128xf32> to vector<64x128xf32>
    %cst_22 = arith.constant dense<0.000000e+00> : vector<16x128xf32>
    %18 = tpu.matmul %15, %17, %cst_22 {dimension_numbers = #tpu.dot_dimension_numbers<[1], [0], [0], [1], [0, 0, 1, 1], [], []>} : vector<16x64xf32>, vector<64x128xf32>, vector<16x128xf32> -> vector<16x128xf32>
    %19 = arith.addf %14, %18 : vector<16x128xf32>
    %c9 = arith.constant 9 : index
    %c0_23 = arith.constant 0 : index
    %20 = vector.load %arg7[%c9, %c0_23] : memref<25x64xf32, #tpu.memory_space<vmem>>, vector<16x64xf32>
    %c2 = arith.constant 2 : index
    %c0_24 = arith.constant 0 : index
    %c0_25 = arith.constant 0 : index
    %21 = vector.load %arg2[%c2, %c0_24, %c0_25] : memref<3x64x128xf32, #tpu.memory_space<vmem>>, vector<1x64x128xf32>
    %22 = vector.shape_cast %21 : vector<1x64x128xf32> to vector<64x128xf32>
    %cst_26 = arith.constant dense<0.000000e+00> : vector<16x128xf32>
    %23 = tpu.matmul %20, %22, %cst_26 {dimension_numbers = #tpu.dot_dimension_numbers<[1], [0], [0], [1], [0, 0, 1, 1], [], []>} : vector<16x64xf32>, vector<64x128xf32>, vector<16x128xf32> -> vector<16x128xf32>
    %24 = arith.addf %19, %23 : vector<16x128xf32>
    %c0_27 = arith.constant 0 : index
    %c0_28 = arith.constant 0 : index
    %25 = vector.load %arg3[%c0_27, %c0_28] : memref<1x128xf32, #tpu.memory_space<vmem>>, vector<1x128xf32>
    %26 = vector.broadcast %25 : vector<1x128xf32> to vector<16x128xf32>
    %27 = arith.addf %24, %26 : vector<16x128xf32>
    %cst_29 = arith.constant 0.000000e+00 : f32
    %28 = vector.broadcast %cst_29 : f32 to vector<16x128xf32>
    %29 = arith.maximumf %27, %28 : vector<16x128xf32>
    %c8_30 = arith.constant 8 : index
    %c0_31 = arith.constant 0 : index
    %30 = vector.load %arg8[%c8_30, %c0_31] : memref<25x128xf32, #tpu.memory_space<vmem>>, vector<16x128xf32>
    tpu.vector_store %arg8[%c8_30, %c0_31], %29 {strides = array<i32>} : memref<25x128xf32, #tpu.memory_space<vmem>>, vector<16x128xf32>,
    %c7_32 = arith.constant 7 : index
    %c0_33 = arith.constant 0 : index
    %31 = vector.load %arg8[%c7_32, %c0_33] : memref<25x128xf32, #tpu.memory_space<vmem>>, vector<16x128xf32>
    %c0_34 = arith.constant 0 : index
    %c0_35 = arith.constant 0 : index
    %c0_36 = arith.constant 0 : index
    %32 = vector.load %arg4[%c0_34, %c0_35, %c0_36] : memref<3x128x256xf32, #tpu.memory_space<vmem>>, vector<1x128x256xf32>
    %33 = vector.shape_cast %32 : vector<1x128x256xf32> to vector<128x256xf32>
    %cst_37 = arith.constant dense<0.000000e+00> : vector<16x256xf32>
    %34 = tpu.matmul %31, %33, %cst_37 {dimension_numbers = #tpu.dot_dimension_numbers<[1], [0], [0], [1], [0, 0, 1, 1], [], []>} : vector<16x128xf32>, vector<128x256xf32>, vector<16x256xf32> -> vector<16x256xf32>
    %c8_38 = arith.constant 8 : index
    %c0_39 = arith.constant 0 : index
    %35 = vector.load %arg8[%c8_38, %c0_39] : memref<25x128xf32, #tpu.memory_space<vmem>>, vector<16x128xf32>
    %c1_40 = arith.constant 1 : index
    %c0_41 = arith.constant 0 : index
    %c0_42 = arith.constant 0 : index
    %36 = vector.load %arg4[%c1_40, %c0_41, %c0_42] : memref<3x128x256xf32, #tpu.memory_space<vmem>>, vector<1x128x256xf32>
    %37 = vector.shape_cast %36 : vector<1x128x256xf32> to vector<128x256xf32>
    %cst_43 = arith.constant dense<0.000000e+00> : vector<16x256xf32>
    %38 = tpu.matmul %35, %37, %cst_43 {dimension_numbers = #tpu.dot_dimension_numbers<[1], [0], [0], [1], [0, 0, 1, 1], [], []>} : vector<16x128xf32>, vector<128x256xf32>, vector<16x256xf32> -> vector<16x256xf32>
    %39 = arith.addf %34, %38 : vector<16x256xf32>
    %c9_44 = arith.constant 9 : index
    %c0_45 = arith.constant 0 : index
    %40 = vector.load %arg8[%c9_44, %c0_45] : memref<25x128xf32, #tpu.memory_space<vmem>>, vector<16x128xf32>
    %c2_46 = arith.constant 2 : index
    %c0_47 = arith.constant 0 : index
    %c0_48 = arith.constant 0 : index
    %41 = vector.load %arg4[%c2_46, %c0_47, %c0_48] : memref<3x128x256xf32, #tpu.memory_space<vmem>>, vector<1x128x256xf32>
    %42 = vector.shape_cast %41 : vector<1x128x256xf32> to vector<128x256xf32>
    %cst_49 = arith.constant dense<0.000000e+00> : vector<16x256xf32>
    %43 = tpu.matmul %40, %42, %cst_49 {dimension_numbers = #tpu.dot_dimension_numbers<[1], [0], [0], [1], [0, 0, 1, 1], [], []>} : vector<16x128xf32>, vector<128x256xf32>, vector<16x256xf32> -> vector<16x256xf32>
    %44 = arith.addf %39, %43 : vector<16x256xf32>
    %c0_50 = arith.constant 0 : index
    %c0_51 = arith.constant 0 : index
    %45 = vector.load %arg5[%c0_50, %c0_51] : memref<1x256xf32, #tpu.memory_space<vmem>>, vector<1x256xf32>
    %46 = vector.broadcast %45 : vector<1x256xf32> to vector<16x256xf32>
    %47 = arith.addf %44, %46 : vector<16x256xf32>
    %cst_52 = arith.constant 0.000000e+00 : f32
    %48 = vector.broadcast %cst_52 : f32 to vector<16x256xf32>
    %49 = arith.maximumf %47, %48 : vector<16x256xf32>
    %c0_53 = arith.constant 0 : index
    %c0_54 = arith.constant 0 : index
    %c0_55 = arith.constant 0 : index
    %50 = vector.load %arg6[%c0_53, %c0_54, %c0_55] : memref<1x16x256xf32, #tpu.memory_space<vmem>>, vector<1x16x256xf32>
    %51 = vector.shape_cast %50 : vector<1x16x256xf32> to vector<16x256xf32>
    %52 = vector.shape_cast %49 : vector<16x256xf32> to vector<1x16x256xf32>
    tpu.vector_store %arg6[%c0_53, %c0_54, %c0_55], %52 {strides = array<i32>} : memref<1x16x256xf32, #tpu.memory_space<vmem>>, vector<1x16x256xf32>,
    return
  }
  func.func @transform_0(%arg0: i32) -> (i32, i32, i32) {
    %c0_i32 = arith.constant 0 : i32
    %c0_i32_0 = arith.constant 0 : i32
    %c0_i32_1 = arith.constant 0 : i32
    return %arg0, %c0_i32, %c0_i32_0 : i32, i32, i32
  }
  func.func @transform_1(%arg0: i32) -> (i32, i32, i32) {
    %c0_i32 = arith.constant 0 : i32
    %c0_i32_0 = arith.constant 0 : i32
    %c0_i32_1 = arith.constant 0 : i32
    %c0_i32_2 = arith.constant 0 : i32
    return %c0_i32, %c0_i32_0, %c0_i32_1 : i32, i32, i32
  }
  func.func @transform_2(%arg0: i32) -> (i32, i32) {
    %c0_i32 = arith.constant 0 : i32
    %c0_i32_0 = arith.constant 0 : i32
    %c0_i32_1 = arith.constant 0 : i32
    return %c0_i32, %c0_i32_0 : i32, i32
  }
  func.func @transform_3(%arg0: i32) -> (i32, i32, i32) {
    %c0_i32 = arith.constant 0 : i32
    %c0_i32_0 = arith.constant 0 : i32
    %c0_i32_1 = arith.constant 0 : i32
    %c0_i32_2 = arith.constant 0 : i32
    return %c0_i32, %c0_i32_0, %c0_i32_1 : i32, i32, i32
  }
  func.func @transform_4(%arg0: i32) -> (i32, i32) {
    %c0_i32 = arith.constant 0 : i32
    %c0_i32_0 = arith.constant 0 : i32
    %c0_i32_1 = arith.constant 0 : i32
    return %c0_i32, %c0_i32_0 : i32, i32
  }
  func.func @transform_5(%arg0: i32) -> (i32, i32, i32) {
    %c0_i32 = arith.constant 0 : i32
    %c0_i32_0 = arith.constant 0 : i32
    %c0_i32_1 = arith.constant 0 : i32
    return %arg0, %c0_i32, %c0_i32_0 : i32, i32, i32
  }
}

</mosaic_0001>

<llo_original>
// kernel: tile.18
$region0: #{tile.18}
  #allocation0 [shape = 's32[1]{0}', space=sflag, size = 0x4, scoped, tag = 'scoped memory for tile.18']
  %s0 = inlined_call_operand.vmem [shape: f32[4], index: 0, kind: input, shape index: {}]
  %s1 = inlined_call_operand.vmem [shape: f32[64,4], index: 1, kind: output, shape index: {}]
  // Predicated region
  $region2: #{tile.18} parent=0 // pred_check
    _
  $region3: #{tile.18} parent=0 // pred_check_branch
    %3 = sbr.rel (0) target = $region5
  $region4: #{tile.18} parent=0 // pred_region
    _
  $region5: #{tile.18} parent=0 // pred_fallthru
    _
  %v4 = vld [vmem:[%s0] ss:$0 sm:$0xff]
  %5 = vst [vmem:[%s1] sm:$0xff] %v4
  %s6 = scalar_lea.vmem %s1, 8
  %7 = vst [vmem:[%s6] sm:$0xff] %v4
  %s8 = scalar_lea.vmem %s1, 16
  %9 = vst [vmem:[%s8] sm:$0xff] %v4
  %s10 = scalar_lea.vmem %s1, 24
  %11 = vst [vmem:[%s10] sm:$0xff] %v4
  %s12 = scalar_lea.vmem %s1, 32
  %13 = vst [vmem:[%s12] sm:$0xff] %v4
  %s14 = scalar_lea.vmem %s1, 40
  %15 = vst [vmem:[%s14] sm:$0xff] %v4
  %s16 = scalar_lea.vmem %s1, 48
  %17 = vst [vmem:[%s16] sm:$0xff] %v4
  %s18 = scalar_lea.vmem %s1, 56
  %19 = vst [vmem:[%s18] sm:$0xff] %v4

// kernel: tile.19
$region0: #{tile.19}
  %s0 = inlined_call_operand.vmem [shape: f32[64,4], index: 0, kind: input, shape index: {}]
  %s1 = inlined_call_operand.vmem [shape: f32[1,256], index: 1, kind: output, shape index: {}]
  $region1: #{tile.19} parent=0
    #allocation0 [shape = 'u8[8192]{0}', space=vmem, size = 0x2000, scoped, tag = 'scoped mem for output reshape']
    %v2 = vld [vmem:[%s0] sm:$0x1]
    %s3 = scalar_lea.vmem %s0, 31
    %v4 = vld [vmem:[%s3] sm:$0x2]
    %vm5 = vcmask 1041409
    %v6 = vsel %vm5, %v4, %v2
    %vm7 = vcmask 31744
    %8 = vst.msk [vmem:[#allocation0] ss:$8 sm:$0x3] %vm7, %v6
    %s9 = scalar_lea.vmem %s0, 31
    %v10 = vld [vmem:[%s9] sm:$0x1]
    %s11 = scalar_lea.vmem %s0, 62
    %v12 = vld [vmem:[%s11] sm:$0x2]
    %vm13 = vcmask 1041409
    %v14 = vsel %vm13, %v12, %v10
    %15 = vrot.lane.b32.xlu0 %v14, 124
    %v16 = vpop.permute.xlu0 %15
    %vm17 = vcmask 1048544
    %18 = vst.msk [vmem:[#allocation0] ss:$8 sm:$0x3] %vm17, %v16
    %s19 = scalar_lea.vmem %s0, 30
    %v20 = vld [vmem:[%s19] sm:$0x1]
    %s21 = scalar_lea.vmem %s0, 61
    %v22 = vld [vmem:[%s21] sm:$0x2]
    %vm23 = vcmask 1041409
    %v24 = vsel %vm23, %v22, %v20
    %25 = vrot.lane.b32.xlu0 %v24, 120
    %v26 = vpop.permute.xlu0 %25
    %vm27 = vcmask 1015744
    %28 = vst.msk [vmem:[#allocation0] ss:$8 sm:$0x3] %vm27, %v26
    %s29 = scalar_lea.vmem %s0, 29
    %v30 = vld [vmem:[%s29] sm:$0x1]
    %s31 = scalar_lea.vmem %s0, 60
    %v32 = vld [vmem:[%s31] sm:$0x2]
    %vm33 = vcmask 1041409
    %v34 = vsel %vm33, %v32, %v30
    %35 = vrot.lane.b32.xlu0 %v34, 116
    %v36 = vpop.permute.xlu0 %35
    %vm37 = vcmask 982944
    %38 = vst.msk [vmem:[#allocation0] ss:$8 sm:$0x3] %vm37, %v36
    %s39 = scalar_lea.vmem %s0, 28
    %v40 = vld [vmem:[%s39] sm:$0x1]
    %s41 = scalar_lea.vmem %s0, 59
    %v42 = vld [vmem:[%s41] sm:$0x2]
    %vm43 = vcmask 1041409
    %v44 = vsel %vm43, %v42, %v40
    %45 = vrot.lane.b32.xlu0 %v44, 112
    %v46 = vpop.permute.xlu0 %45
    %vm47 = vcmask 950144
    %48 = vst.msk [vmem:[#allocation0] ss:$8 sm:$0x3] %vm47, %v46
    %s49 = scalar_lea.vmem %s0, 27
    %v50 = vld [vmem:[%s49] sm:$0x1]
    %s51 = scalar_lea.vmem %s0, 58
    %v52 = vld [vmem:[%s51] sm:$0x2]
    %vm53 = vcmask 1041409
    %v54 = vsel %vm53, %v52, %v50
    %55 = vrot.lane.b32.xlu0 %v54, 108
    %v56 = vpop.permute.xlu0 %55
    %vm57 = vcmask 917344
    %58 = vst.msk [vmem:[#allocation0] ss:$8 sm:$0x3] %vm57, %v56
    %s59 = scalar_lea.vmem %s0, 26
    %v60 = vld [vmem:[%s59] sm:$0x1]
    %s61 = scalar_lea.vmem %s0, 57
    %v62 = vld [vmem:[%s61] sm:$0x2]
    %vm63 = vcmask 1041409
    %v64 = vsel %vm63, %v62, %v60
    %65 = vrot.lane.b32.xlu0 %v64, 104
    %v66 = vpop.permute.xlu0 %65
    %vm67 = vcmask 884544
    %68 = vst.msk [vmem:[#allocation0] ss:$8 sm:$0x3] %vm67, %v66
    %s69 = scalar_lea.vmem %s0, 25
    %v70 = vld [vmem:[%s69] sm:$0x1]
    %s71 = scalar_lea.vmem %s0, 56
    %v72 = vld [vmem:[%s71] sm:$0x2]
    %vm73 = vcmask 1041409
    %v74 = vsel %vm73, %v72, %v70
    %75 = vrot.lane.b32.xlu0 %v74, 100
    %v76 = vpop.permute.xlu0 %75
    %vm77 = vcmask 851744
    %78 = vst.msk [vmem:[#allocation0] ss:$8 sm:$0x3] %vm77, %v76
    %s79 = scalar_lea.vmem %s0, 24
    %v80 = vld [vmem:[%s79] sm:$0x1]
    %s81 = scalar_lea.vmem %s0, 55
    %v82 = vld [vmem:[%s81] sm:$0x2]
    %vm83 = vcmask 1041409
    %v84 = vsel %vm83, %v82, %v80
    %85 = vrot.lane.b32.xlu0 %v84, 96
    %v86 = vpop.permute.xlu0 %85
    %vm87 = vcmask 818944
    %88 = vst.msk [vmem:[#allocation0] ss:$8 sm:$0x3] %vm87, %v86
    %s89 = scalar_lea.vmem %s0, 23
    %v90 = vld [vmem:[%s89] sm:$0x1]
    %s91 = scalar_lea.vmem %s0, 54
    %v92 = vld [vmem:[%s91] sm:$0x2]
    %vm93 = vcmask 1041409
    %v94 = vsel %vm93, %v92, %v90
    %95 = vrot.lane.b32.xlu0 %v94, 92
    %v96 = vpop.permute.xlu0 %95
    %vm97 = vcmask 786144
    %98 = vst.msk [vmem:[#allocation0] ss:$8 sm:$0x3] %vm97, %v96
    %s99 = scalar_lea.vmem %s0, 22
    %v100 = vld [vmem:[%s99] sm:$0x1]
    %s101 = scalar_lea.vmem %s0, 53
    %v102 = vld [vmem:[%s101] sm:$0x2]
    %vm103 = vcmask 1041409
    %v104 = vsel %vm103, %v102, %v100
    %105 = vrot.lane.b32.xlu0 %v104, 88
    %v106 = vpop.permute.xlu0 %105
    %vm107 = vcmask 753344
    %108 = vst.msk [vmem:[#allocation0] ss:$8 sm:$0x3] %vm107, %v106
    %s109 = scalar_lea.vmem %s0, 21
    %v110 = vld [vmem:[%s109] sm:$0x1]
    %s111 = scalar_lea.vmem %s0, 52
    %v112 = vld [vmem:[%s111] sm:$0x2]
    %vm113 = vcmask 1041409
    %v114 = vsel %vm113, %v112, %v110
    %115 = vrot.lane.b32.xlu0 %v114, 84
    %v116 = vpop.permute.xlu0 %115
    %vm117 = vcmask 720544
    %118 = vst.msk [vmem:[#allocation0] ss:$8 sm:$0x3] %vm117, %v116
    %s119 = scalar_lea.vmem %s0, 20
    %v120 = vld [vmem:[%s119] sm:$0x1]
    %s121 = scalar_lea.vmem %s0, 51
    %v122 = vld [vmem:[%s121] sm:$0x2]
    %vm123 = vcmask 1041409
    %v124 = vsel %vm123, %v122, %v120
    %125 = vrot.lane.b32.xlu0 %v124, 80
    %v126 = vpop.permute.xlu0 %125
    %vm127 = vcmask 687744
    %128 = vst.msk [vmem:[#allocation0] ss:$8 sm:$0x3] %vm127, %v126
    %s129 = scalar_lea.vmem %s0, 19
    %v130 = vld [vmem:[%s129] sm:$0x1]
    %s131 = scalar_lea.vmem %s0, 50
    %v132 = vld [vmem:[%s131] sm:$0x2]
    %vm133 = vcmask 1041409
    %v134 = vsel %vm133, %v132, %v130
    %135 = vrot.lane.b32.xlu0 %v134, 76
    %v136 = vpop.permute.xlu0 %135
    %vm137 = vcmask 654944
    %138 = vst.msk [vmem:[#allocation0] ss:$8 sm:$0x3] %vm137, %v136
    %s139 = scalar_lea.vmem %s0, 18
    %v140 = vld [vmem:[%s139] sm:$0x1]
    %s141 = scalar_lea.vmem %s0, 49
    %v142 = vld [vmem:[%s141] sm:$0x2]
    %vm143 = vcmask 1041409
    %v144 = vsel %vm143, %v142, %v140
    %145 = vrot.lane.b32.xlu0 %v144, 72
    %v146 = vpop.permute.xlu0 %145
    %vm147 = vcmask 622144
    %148 = vst.msk [vmem:[#allocation0] ss:$8 sm:$0x3] %vm147, %v146
    %s149 = scalar_lea.vmem %s0, 17
    %v150 = vld [vmem:[%s149] sm:$0x1]
    %s151 = scalar_lea.vmem %s0, 48
    %v152 = vld [vmem:[%s151] sm:$0x2]
    %vm153 = vcmask 1041409
    %v154 = vsel %vm153, %v152, %v150
    %155 = vrot.lane.b32.xlu0 %v154, 68
    %v156 = vpop.permute.xlu0 %155
    %vm157 = vcmask 589344
    %158 = vst.msk [vmem:[#allocation0] ss:$8 sm:$0x3] %vm157, %v156
    %s159 = scalar_lea.vmem %s0, 16
    %v160 = vld [vmem:[%s159] sm:$0x1]
    %s161 = scalar_lea.vmem %s0, 47
    %v162 = vld [vmem:[%s161] sm:$0x2]
    %vm163 = vcmask 1041409
    %v164 = vsel %vm163, %v162, %v160
    %165 = vrot.lane.b32.xlu0 %v164, 64
    %v166 = vpop.permute.xlu0 %165
    %vm167 = vcmask 556544
    %168 = vst.msk [vmem:[#allocation0] ss:$8 sm:$0x3] %vm167, %v166
    %s169 = scalar_lea.vmem %s0, 15
    %v170 = vld [vmem:[%s169] sm:$0x1]
    %s171 = scalar_lea.vmem %s0, 46
    %v172 = vld [vmem:[%s171] sm:$0x2]
    %vm173 = vcmask 1041409
    %v174 = vsel %vm173, %v172, %v170
    %175 = vrot.lane.b32.xlu0 %v174, 60
    %v176 = vpop.permute.xlu0 %175
    %vm177 = vcmask 523744
    %178 = vst.msk [vmem:[#allocation0] ss:$8 sm:$0x3] %vm177, %v176
    %s179 = scalar_lea.vmem %s0, 14
    %v180 = vld [vmem:[%s179] sm:$0x1]
    %s181 = scalar_lea.vmem %s0, 45
    %v182 = vld [vmem:[%s181] sm:$0x2]
    %vm183 = vcmask 1041409
    %v184 = vsel %vm183, %v182, %v180
    %185 = vrot.lane.b32.xlu0 %v184, 56
    %v186 = vpop.permute.xlu0 %185
    %vm187 = vcmask 490944
    %188 = vst.msk [vmem:[#allocation0] ss:$8 sm:$0x3] %vm187, %v186
    %s189 = scalar_lea.vmem %s0, 13
    %v190 = vld [vmem:[%s189] sm:$0x1]
    %s191 = scalar_lea.vmem %s0, 44
    %v192 = vld [vmem:[%s191] sm:$0x2]
    %vm193 = vcmask 1041409
    %v194 = vsel %vm193, %v192, %v190
    %195 = vrot.lane.b32.xlu0 %v194, 52
    %v196 = vpop.permute.xlu0 %195
    %vm197 = vcmask 458144
    %198 = vst.msk [vmem:[#allocation0] ss:$8 sm:$0x3] %vm197, %v196
    %s199 = scalar_lea.vmem %s0, 12
    %v200 = vld [vmem:[%s199] sm:$0x1]
    %s201 = scalar_lea.vmem %s0, 43
    %v202 = vld [vmem:[%s201] sm:$0x2]
    %vm203 = vcmask 1041409
    %v204 = vsel %vm203, %v202, %v200
    %205 = vrot.lane.b32.xlu0 %v204, 48
    %v206 = vpop.permute.xlu0 %205
    %vm207 = vcmask 425344
    %208 = vst.msk [vmem:[#allocation0] ss:$8 sm:$0x3] %vm207, %v206
    %s209 = scalar_lea.vmem %s0, 11
    %v210 = vld [vmem:[%s209] sm:$0x1]
    %s211 = scalar_lea.vmem %s0, 42
    %v212 = vld [vmem:[%s211] sm:$0x2]
    %vm213 = vcmask 1041409
    %v214 = vsel %vm213, %v212, %v210
    %215 = vrot.lane.b32.xlu0 %v214, 44
    %v216 = vpop.permute.xlu0 %215
    %vm217 = vcmask 392544
    %218 = vst.msk [vmem:[#allocation0] ss:$8 sm:$0x3] %vm217, %v216
    %s219 = scalar_lea.vmem %s0, 10
    %v220 = vld [vmem:[%s219] sm:$0x1]
    %s221 = scalar_lea.vmem %s0, 41
    %v222 = vld [vmem:[%s221] sm:$0x2]
    %vm223 = vcmask 1041409
    %v224 = vsel %vm223, %v222, %v220
    %225 = vrot.lane.b32.xlu0 %v224, 40
    %v226 = vpop.permute.xlu0 %225
    %vm227 = vcmask 359744
    %228 = vst.msk [vmem:[#allocation0] ss:$8 sm:$0x3] %vm227, %v226
    %s229 = scalar_lea.vmem %s0, 9
    %v230 = vld [vmem:[%s229] sm:$0x1]
    %s231 = scalar_lea.vmem %s0, 40
    %v232 = vld [vmem:[%s231] sm:$0x2]
    %vm233 = vcmask 1041409
    %v234 = vsel %vm233, %v232, %v230
    %235 = vrot.lane.b32.xlu0 %v234, 36
    %v236 = vpop.permute.xlu0 %235
    %vm237 = vcmask 326944
    %238 = vst.msk [vmem:[#allocation0] ss:$8 sm:$0x3] %vm237, %v236
    %s239 = scalar_lea.vmem %s0, 8
    %v240 = vld [vmem:[%s239] sm:$0x1]
    %s241 = scalar_lea.vmem %s0, 39
    %v242 = vld [vmem:[%s241] sm:$0x2]
    %vm243 = vcmask 1041409
    %v244 = vsel %vm243, %v242, %v240
    %245 = vrot.lane.b32.xlu0 %v244, 32
    %v246 = vpop.permute.xlu0 %245
    %vm247 = vcmask 294144
    %248 = vst.msk [vmem:[#allocation0] ss:$8 sm:$0x3] %vm247, %v246
    %s249 = scalar_lea.vmem %s0, 7
    %v250 = vld [vmem:[%s249] sm:$0x1]
    %s251 = scalar_lea.vmem %s0, 38
    %v252 = vld [vmem:[%s251] sm:$0x2]
    %vm253 = vcmask 1041409
    %v254 = vsel %vm253, %v252, %v250
    %255 = vrot.lane.b32.xlu0 %v254, 28
    %v256 = vpop.permute.xlu0 %255
    %vm257 = vcmask 261344
    %258 = vst.msk [vmem:[#allocation0] ss:$8 sm:$0x3] %vm257, %v256
    %s259 = scalar_lea.vmem %s0, 6
    %v260 = vld [vmem:[%s259] sm:$0x1]
    %s261 = scalar_lea.vmem %s0, 37
    %v262 = vld [vmem:[%s261] sm:$0x2]
    %vm263 = vcmask 1041409
    %v264 = vsel %vm263, %v262, %v260
    %265 = vrot.lane.b32.xlu0 %v264, 24
    %v266 = vpop.permute.xlu0 %265
    %vm267 = vcmask 228544
    %268 = vst.msk [vmem:[#allocation0] ss:$8 sm:$0x3] %vm267, %v266
    %s269 = scalar_lea.vmem %s0, 5
    %v270 = vld [vmem:[%s269] sm:$0x1]
    %s271 = scalar_lea.vmem %s0, 36
    %v272 = vld [vmem:[%s271] sm:$0x2]
    %vm273 = vcmask 1041409
    %v274 = vsel %vm273, %v272, %v270
    %275 = vrot.lane.b32.xlu0 %v274, 20
    %v276 = vpop.permute.xlu0 %275
    %vm277 = vcmask 195744
    %278 = vst.msk [vmem:[#allocation0] ss:$8 sm:$0x3] %vm277, %v276
    %s279 = scalar_lea.vmem %s0, 4
    %v280 = vld [vmem:[%s279] sm:$0x1]
    %s281 = scalar_lea.vmem %s0, 35
    %v282 = vld [vmem:[%s281] sm:$0x2]
    %vm283 = vcmask 1041409
    %v284 = vsel %vm283, %v282, %v280
    %285 = vrot.lane.b32.xlu0 %v284, 16
    %v286 = vpop.permute.xlu0 %285
    %vm287 = vcmask 162944
    %288 = vst.msk [vmem:[#allocation0] ss:$8 sm:$0x3] %vm287, %v286
    %s289 = scalar_lea.vmem %s0, 3
    %v290 = vld [vmem:[%s289] sm:$0x1]
    %s291 = scalar_lea.vmem %s0, 34
    %v292 = vld [vmem:[%s291] sm:$0x2]
    %vm293 = vcmask 1041409
    %v294 = vsel %vm293, %v292, %v290
    %295 = vrot.lane.b32.xlu0 %v294, 12
    %v296 = vpop.permute.xlu0 %295
    %vm297 = vcmask 130144
    %298 = vst.msk [vmem:[#allocation0] ss:$8 sm:$0x3] %vm297, %v296
    %s299 = scalar_lea.vmem %s0, 2
    %v300 = vld [vmem:[%s299] sm:$0x1]
    %s301 = scalar_lea.vmem %s0, 33
    %v302 = vld [vmem:[%s301] sm:$0x2]
    %vm303 = vcmask 1041409
    %v304 = vsel %vm303, %v302, %v300
    %305 = vrot.lane.b32.xlu0 %v304, 8
    %v306 = vpop.permute.xlu0 %305
    %vm307 = vcmask 97344
    %308 = vst.msk [vmem:[#allocation0] ss:$8 sm:$0x3] %vm307, %v306
    %s309 = scalar_lea.vmem %s0, 1
    %v310 = vld [vmem:[%s309] sm:$0x1]
    %s311 = scalar_lea.vmem %s0, 32
    %v312 = vld [vmem:[%s311] sm:$0x2]
    %vm313 = vcmask 1041409
    %v314 = vsel %vm313, %v312, %v310
    %315 = vrot.lane.b32.xlu0 %v314, 4
    %v316 = vpop.permute.xlu0 %315
    %vm317 = vcmask 64544
    %318 = vst.msk [vmem:[#allocation0] ss:$8 sm:$0x3] %vm317, %v316
    %s320 = sshllo.u32 0, 1
    %v322 = vld [vmem:[#allocation0] sm:%s320]
    %s323 = sshllo.u32 0, 1
    %324 = vst [vmem:[%s1] sm:%s323] %v322
    %s325 = scalar_lea.vmem [#allocation0], 8
    %v326 = vld [vmem:[%s325] sm:%s320]
    %s327 = sshllo.u32 0, 1
    %s328 = scalar_lea.vmem %s1, 1
    %329 = vst [vmem:[%s328] sm:%s327] %v326

// kernel: tile.13
$region0: #{tile.13}
  #allocation0 [shape = 's32[1]{0}', space=sflag, size = 0x4, scoped, tag = 'scoped memory for tile.13']
  %s0 = inlined_call_operand.vmem [shape: f32[8], index: 0, kind: input, shape index: {}]
  %s1 = inlined_call_operand.vmem [shape: f32[16,8], index: 1, kind: output, shape index: {}]
  // Predicated region
  $region2: #{tile.13} parent=0 // pred_check
    _
  $region3: #{tile.13} parent=0 // pred_check_branch
    %3 = sbr.rel (0) target = $region5
  $region4: #{tile.13} parent=0 // pred_region
    _
  $region5: #{tile.13} parent=0 // pred_fallthru
    _
  %v4 = vld [vmem:[%s0] ss:$0 sm:$0xff]
  %5 = vst [vmem:[%s1] sm:$0xff] %v4
  %s6 = scalar_lea.vmem %s1, 8
  %7 = vst [vmem:[%s6] sm:$0xff] %v4

// kernel: tile.14
$region0: #{tile.14}
  %s0 = inlined_call_operand.vmem [shape: f32[16,8], index: 0, kind: input, shape index: {}]
  %s1 = inlined_call_operand.vmem [shape: f32[1,128], index: 1, kind: output, shape index: {}]
  $region1: #{tile.14} parent=0
    #allocation0 [shape = 'u8[4096]{0}', space=vmem, size = 0x1000, scoped, tag = 'scoped mem for output reshape']
    %v2 = vld [vmem:[%s0] sm:$0x1]
    %vm3 = vcmask 64512
    %4 = vst.msk [vmem:[#allocation0] sm:$0x1] %vm3, %v2
    %s5 = scalar_lea.vmem %s0, 15
    %v6 = vld [vmem:[%s5] sm:$0x1]
    %7 = vrot.lane.b32.xlu0 %v6, 120
    %v8 = vpop.permute.xlu0 %7
    %vm9 = vcmask 1048512
    %10 = vst.msk [vmem:[#allocation0] sm:$0x1] %vm9, %v8
    %s11 = scalar_lea.vmem %s0, 14
    %v12 = vld [vmem:[%s11] sm:$0x1]
    %13 = vrot.lane.b32.xlu0 %v12, 112
    %v14 = vpop.permute.xlu0 %13
    %vm15 = vcmask 982912
    %16 = vst.msk [vmem:[#allocation0] sm:$0x1] %vm15, %v14
    %s17 = scalar_lea.vmem %s0, 13
    %v18 = vld [vmem:[%s17] sm:$0x1]
    %19 = vrot.lane.b32.xlu0 %v18, 104
    %v20 = vpop.permute.xlu0 %19
    %vm21 = vcmask 917312
    %22 = vst.msk [vmem:[#allocation0] sm:$0x1] %vm21, %v20
    %s23 = scalar_lea.vmem %s0, 12
    %v24 = vld [vmem:[%s23] sm:$0x1]
    %25 = vrot.lane.b32.xlu0 %v24, 96
    %v26 = vpop.permute.xlu0 %25
    %vm27 = vcmask 851712
    %28 = vst.msk [vmem:[#allocation0] sm:$0x1] %vm27, %v26
    %s29 = scalar_lea.vmem %s0, 11
    %v30 = vld [vmem:[%s29] sm:$0x1]
    %31 = vrot.lane.b32.xlu0 %v30, 88
    %v32 = vpop.permute.xlu0 %31
    %vm33 = vcmask 786112
    %34 = vst.msk [vmem:[#allocation0] sm:$0x1] %vm33, %v32
    %s35 = scalar_lea.vmem %s0, 10
    %v36 = vld [vmem:[%s35] sm:$0x1]
    %37 = vrot.lane.b32.xlu0 %v36, 80
    %v38 = vpop.permute.xlu0 %37
    %vm39 = vcmask 720512
    %40 = vst.msk [vmem:[#allocation0] sm:$0x1] %vm39, %v38
    %s41 = scalar_lea.vmem %s0, 9
    %v42 = vld [vmem:[%s41] sm:$0x1]
    %43 = vrot.lane.b32.xlu0 %v42, 72
    %v44 = vpop.permute.xlu0 %43
    %vm45 = vcmask 654912
    %46 = vst.msk [vmem:[#allocation0] sm:$0x1] %vm45, %v44
    %s47 = scalar_lea.vmem %s0, 8
    %v48 = vld [vmem:[%s47] sm:$0x1]
    %49 = vrot.lane.b32.xlu0 %v48, 64
    %v50 = vpop.permute.xlu0 %49
    %vm51 = vcmask 589312
    %52 = vst.msk [vmem:[#allocation0] sm:$0x1] %vm51, %v50
    %s53 = scalar_lea.vmem %s0, 7
    %v54 = vld [vmem:[%s53] sm:$0x1]
    %55 = vrot.lane.b32.xlu0 %v54, 56
    %v56 = vpop.permute.xlu0 %55
    %vm57 = vcmask 523712
    %58 = vst.msk [vmem:[#allocation0] sm:$0x1] %vm57, %v56
    %s59 = scalar_lea.vmem %s0, 6
    %v60 = vld [vmem:[%s59] sm:$0x1]
    %61 = vrot.lane.b32.xlu0 %v60, 48
    %v62 = vpop.permute.xlu0 %61
    %vm63 = vcmask 458112
    %64 = vst.msk [vmem:[#allocation0] sm:$0x1] %vm63, %v62
    %s65 = scalar_lea.vmem %s0, 5
    %v66 = vld [vmem:[%s65] sm:$0x1]
    %67 = vrot.lane.b32.xlu0 %v66, 40
    %v68 = vpop.permute.xlu0 %67
    %vm69 = vcmask 392512
    %70 = vst.msk [vmem:[#allocation0] sm:$0x1] %vm69, %v68
    %s71 = scalar_lea.vmem %s0, 4
    %v72 = vld [vmem:[%s71] sm:$0x1]
    %73 = vrot.lane.b32.xlu0 %v72, 32
    %v74 = vpop.permute.xlu0 %73
    %vm75 = vcmask 326912
    %76 = vst.msk [vmem:[#allocation0] sm:$0x1] %vm75, %v74
    %s77 = scalar_lea.vmem %s0, 3
    %v78 = vld [vmem:[%s77] sm:$0x1]
    %79 = vrot.lane.b32.xlu0 %v78, 24
    %v80 = vpop.permute.xlu0 %79
    %vm81 = vcmask 261312
    %82 = vst.msk [vmem:[#allocation0] sm:$0x1] %vm81, %v80
    %s83 = scalar_lea.vmem %s0, 2
    %v84 = vld [vmem:[%s83] sm:$0x1]
    %85 = vrot.lane.b32.xlu0 %v84, 16
    %v86 = vpop.permute.xlu0 %85
    %vm87 = vcmask 195712
    %88 = vst.msk [vmem:[#allocation0] sm:$0x1] %vm87, %v86
    %s89 = scalar_lea.vmem %s0, 1
    %v90 = vld [vmem:[%s89] sm:$0x1]
    %91 = vrot.lane.b32.xlu0 %v90, 8
    %v92 = vpop.permute.xlu0 %91
    %vm93 = vcmask 130112
    %94 = vst.msk [vmem:[#allocation0] sm:$0x1] %vm93, %v92
    %s96 = sshllo.u32 0, 1
    %v98 = vld [vmem:[#allocation0] sm:%s96]
    %s99 = sshllo.u32 0, 1
    %100 = vst [vmem:[%s1] sm:%s99] %v98

// kernel: decoder_block_v2.1
$region0: #{decoder_block_v2.1}
  #allocation0 [shape = 'u32[]', space=smem, size = 0x4, offset = 0x4, fixed_abs, tag = 'smem constant byte address 0x4 - core index']
  #allocation1 [shape = 'u32[144,128]{1,0:T(1,128)}', space=vmem, size = 0x12000, scoped, tag = 'internal scratch']
  #allocation2 [shape = 'f32[25,64]{1,0:T(8,128)}', space=vmem, size = 0x4000, scoped, tag = 'scratch operand']
  #allocation3 [shape = 'f32[25,128]{1,0:T(8,128)}', space=vmem, size = 0x4000, scoped, tag = 'scratch operand']
  %s0 = inlined_call_operand.vmem [shape: f32[2,16,64], index: 0, kind: input, shape index: {}]
  %s1 = inlined_call_operand.vmem [shape: f32[3,64,128], index: 1, kind: input, shape index: {}]
  %s2 = inlined_call_operand.vmem [shape: f32[1,128], index: 2, kind: input, shape index: {}]
  %s3 = inlined_call_operand.vmem [shape: f32[3,128,256], index: 3, kind: input, shape index: {}]
  %s4 = inlined_call_operand.vmem [shape: f32[1,256], index: 4, kind: input, shape index: {}]
  %s5 = inlined_call_operand.vmem [shape: f32[2,16,256], index: 5, kind: output, shape index: {}]
  %s6 = sld [smem:[#allocation0]]
  $region53: #{decoder_block_v2.1} parent=0
    _
  %s8 = ssub.s32 1, %s6
  %s9 = scalar_select 0, %s8, %s6
  loop: start=0, step=1, limit=4
  $region2: #{decoder_block_v2.1} parent=0 // loop_pre_header
    _
  $region3: #{decoder_block_v2.1} parent=0 // loop_header
    %s11 = sphi 0, %s15
    %p12 = scmp.ge.s32.totalorder %s11, 4
    %s21 = sphi 0, %s23
    %s24 = sphi 0, %s21
    %s25 = sphi 0, %s24
    %s41 = sphi 0, %s25
    %s45 = sphi 0, %s45
    %s47 = sphi 0, %s45
    %s48 = sphi 0, %s47
    %s62 = sphi 0, %s48
    %s66 = sphi 0, %s66
    %s68 = sphi 0, %s66
    %s69 = sphi 0, %s68
    %s83 = sphi 0, %s69
    %s87 = sphi 0, %s87
    %s89 = sphi 0, %s87
    %s90 = sphi 0, %s89
    %s104 = sphi 0, %s90
    %s108 = sphi 0, %s108
    %s110 = sphi 0, %s108
    %s111 = sphi 0, %s110
    %s125 = sphi 0, %s111
    %s131 = sphi 0, %s133
    %s134 = sphi 0, %s131
    %s135 = sphi 0, %s134
    %s151 = sphi 0, %s135
  $region4: #{decoder_block_v2.1} parent=0 // loop_header_branch
    %14 = sbr.rel (%p12) target = $region8
  $region5: #{decoder_block_v2.1} parent=0 // loop_body
    %s16 = ssub.s32 %s11, 1
    %s17 = ssub.s32 %s11, 2
    %s18 = sadd.s32 %s11, 1
    %s19 = ssub.s32 %s11, %s18
    %p20 = scmp.eq.s32.totalorder %s19, 0
    %s22 = sadd.s32 %s21, 1
    %s23 = scalar_select %p20, %s21, %s22
    %p26 = pneg %p20
    %p27 = scmp.eq.s32.totalorder %s11, 1
    %p28 = por %p26, %p27
    %p29 = scmp.ne.s32.totalorder %s21, %s24
    %p30 = scmp.eq.s32.totalorder %s11, 0
    %p31 = por %p29, %p30
    %p32 = scmp.ne.s32.totalorder %s21, %s24
    %p33 = scmp.eq.s32.totalorder %s16, 1
    %p34 = por %p32, %p33
    %p35 = scmp.ne.s32.totalorder %s24, %s25
    %p36 = scmp.eq.s32.totalorder %s16, 0
    %p37 = por %p35, %p36
    %p38 = scmp.ne.s32.totalorder %s24, %s25
    %p39 = scmp.eq.s32.totalorder %s17, 1
    %p40 = por %p38, %p39
    %p42 = scmp.ne.s32.totalorder %s25, %s41
    %p43 = scmp.eq.s32.totalorder %s17, 0
    %p44 = por %p42, %p43
    %s46 = sadd.s32 %s45, 1
    %p49 = scmp.eq.s32.totalorder %s11, 1
    %p50 = scmp.ne.s32.totalorder %s45, %s47
    %p51 = scmp.eq.s32.totalorder %s11, 0
    %p52 = por %p50, %p51
    %p53 = scmp.ne.s32.totalorder %s45, %s47
    %p54 = scmp.eq.s32.totalorder %s16, 1
    %p55 = por %p53, %p54
    %p56 = scmp.ne.s32.totalorder %s47, %s48
    %p57 = scmp.eq.s32.totalorder %s16, 0
    %p58 = por %p56, %p57
    %p59 = scmp.ne.s32.totalorder %s47, %s48
    %p60 = scmp.eq.s32.totalorder %s17, 1
    %p61 = por %p59, %p60
    %p63 = scmp.ne.s32.totalorder %s48, %s62
    %p64 = scmp.eq.s32.totalorder %s17, 0
    %p65 = por %p63, %p64
    %s67 = sadd.s32 %s66, 1
    %p70 = scmp.eq.s32.totalorder %s11, 1
    %p71 = scmp.ne.s32.totalorder %s66, %s68
    %p72 = scmp.eq.s32.totalorder %s11, 0
    %p73 = por %p71, %p72
    %p74 = scmp.ne.s32.totalorder %s66, %s68
    %p75 = scmp.eq.s32.totalorder %s16, 1
    %p76 = por %p74, %p75
    %p77 = scmp.ne.s32.totalorder %s68, %s69
    %p78 = scmp.eq.s32.totalorder %s16, 0
    %p79 = por %p77, %p78
    %p80 = scmp.ne.s32.totalorder %s68, %s69
    %p81 = scmp.eq.s32.totalorder %s17, 1
    %p82 = por %p80, %p81
    %p84 = scmp.ne.s32.totalorder %s69, %s83
    %p85 = scmp.eq.s32.totalorder %s17, 0
    %p86 = por %p84, %p85
    %s88 = sadd.s32 %s87, 1
    %p91 = scmp.eq.s32.totalorder %s11, 1
    %p92 = scmp.ne.s32.totalorder %s87, %s89
    %p93 = scmp.eq.s32.totalorder %s11, 0
    %p94 = por %p92, %p93
    %p95 = scmp.ne.s32.totalorder %s87, %s89
    %p96 = scmp.eq.s32.totalorder %s16, 1
    %p97 = por %p95, %p96
    %p98 = scmp.ne.s32.totalorder %s89, %s90
    %p99 = scmp.eq.s32.totalorder %s16, 0
    %p100 = por %p98, %p99
    %p101 = scmp.ne.s32.totalorder %s89, %s90
    %p102 = scmp.eq.s32.totalorder %s17, 1
    %p103 = por %p101, %p102
    %p105 = scmp.ne.s32.totalorder %s90, %s104
    %p106 = scmp.eq.s32.totalorder %s17, 0
    %p107 = por %p105, %p106
    %s109 = sadd.s32 %s108, 1
    %p112 = scmp.eq.s32.totalorder %s11, 1
    %p113 = scmp.ne.s32.totalorder %s108, %s110
    %p114 = scmp.eq.s32.totalorder %s11, 0
    %p115 = por %p113, %p114
    %p116 = scmp.ne.s32.totalorder %s108, %s110
    %p117 = scmp.eq.s32.totalorder %s16, 1
    %p118 = por %p116, %p117
    %p119 = scmp.ne.s32.totalorder %s110, %s111
    %p120 = scmp.eq.s32.totalorder %s16, 0
    %p121 = por %p119, %p120
    %p122 = scmp.ne.s32.totalorder %s110, %s111
    %p123 = scmp.eq.s32.totalorder %s17, 1
    %p124 = por %p122, %p123
    %p126 = scmp.ne.s32.totalorder %s111, %s125
    %p127 = scmp.eq.s32.totalorder %s17, 0
    %p128 = por %p126, %p127
    %s129 = ssub.s32 %s11, %s18
    %p130 = scmp.eq.s32.totalorder %s129, 0
    %s132 = sadd.s32 %s131, 1
    %s133 = scalar_select %p130, %s131, %s132
    %p136 = pneg %p130
    %p137 = scmp.eq.s32.totalorder %s11, 1
    %p138 = por %p136, %p137
    %p139 = scmp.ne.s32.totalorder %s131, %s134
    %p140 = scmp.eq.s32.totalorder %s11, 0
    %p141 = por %p139, %p140
    %p142 = scmp.ne.s32.totalorder %s131, %s134
    %p143 = scmp.eq.s32.totalorder %s16, 1
    %p144 = por %p142, %p143
    %p145 = scmp.ne.s32.totalorder %s134, %s135
    %p146 = scmp.eq.s32.totalorder %s16, 0
    %p147 = por %p145, %p146
    %p148 = scmp.ne.s32.totalorder %s134, %s135
    %p149 = scmp.eq.s32.totalorder %s17, 1
    %p150 = por %p148, %p149
    %p152 = scmp.ne.s32.totalorder %s135, %s151
    %p153 = scmp.eq.s32.totalorder %s17, 0
    %p154 = por %p152, %p153
    %p155 = scmp.le.s32.totalorder 1, %s11
    %p156 = scmp.lt.s32.totalorder %s11, 3
    %p157 = pnand %p155, %p156
    %p158 = pneg %p157
    // Predicated region
    $region9: #{decoder_block_v2.1} parent=5 // pred_check
      _
    $region10: #{decoder_block_v2.1} parent=5 // pred_check_branch
      %160 = sbr.rel (%p157) target = $region12
    $region11: #{decoder_block_v2.1} parent=5 // pred_region
      %s161 = ssub.s32 %s11, 1
      // Predicated region
      $region13: #{decoder_block_v2.1} parent=11 // pred_check
        %p162 = pneg %p58
      $region14: #{decoder_block_v2.1} parent=11 // pred_check_branch
        %164 = sbr.rel (%p162) target = $region16
      $region15: #{decoder_block_v2.1} parent=11 // pred_region
        _
      $region16: #{decoder_block_v2.1} parent=11 // pred_fallthru
        _
      // Predicated region
      $region17: #{decoder_block_v2.1} parent=11 // pred_check
        %p165 = pneg %p79
      $region18: #{decoder_block_v2.1} parent=11 // pred_check_branch
        %167 = sbr.rel (%p165) target = $region20
      $region19: #{decoder_block_v2.1} parent=11 // pred_region
        _
      $region20: #{decoder_block_v2.1} parent=11 // pred_fallthru
        _
      // Predicated region
      $region21: #{decoder_block_v2.1} parent=11 // pred_check
        %p168 = pneg %p100
      $region22: #{decoder_block_v2.1} parent=11 // pred_check_branch
        %170 = sbr.rel (%p168) target = $region24
      $region23: #{decoder_block_v2.1} parent=11 // pred_region
        _
      $region24: #{decoder_block_v2.1} parent=11 // pred_fallthru
        _
      // Predicated region
      $region25: #{decoder_block_v2.1} parent=11 // pred_check
        %p171 = pneg %p121
      $region26: #{decoder_block_v2.1} parent=11 // pred_check_branch
        %173 = sbr.rel (%p171) target = $region28
      $region27: #{decoder_block_v2.1} parent=11 // pred_region
        _
      $region28: #{decoder_block_v2.1} parent=11 // pred_fallthru
        _
    $region12: #{decoder_block_v2.1} parent=5 // pred_fallthru
      _
    %p174 = scmp.lt.s32.totalorder %s11, 2
    // Predicated region
    $region29: #{decoder_block_v2.1} parent=5 // pred_check
      %p175 = pneg %p174
    $region30: #{decoder_block_v2.1} parent=5 // pred_check_branch
      %177 = sbr.rel (%p175) target = $region32
    $region31: #{decoder_block_v2.1} parent=5 // pred_region
      // Predicated region
      $region33: #{decoder_block_v2.1} parent=31 // pred_check
        %p178 = pneg %p31
      $region34: #{decoder_block_v2.1} parent=31 // pred_check_branch
        %180 = sbr.rel (%p178) target = $region36
      $region35: #{decoder_block_v2.1} parent=31 // pred_region
        %p181 = scmp.lt.s32.totalorder %s11, 1
        %s182 = scalar_select %p181, %s11, 1
        %s183 = smul.addr %s182, 2
        %s184 = smul.addr %s183, 8
        %s185 = scalar_lea.vmem %s0, %s184
      $region36: #{decoder_block_v2.1} parent=31 // pred_fallthru
        _
    $region32: #{decoder_block_v2.1} parent=5 // pred_fallthru
      _
    %p186 = scmp.le.s32.totalorder 1, %s11
    %p187 = scmp.lt.s32.totalorder %s11, 3
    %p188 = pnand %p186, %p187
    %p189 = pneg %p188
    // Predicated region
    $region37: #{decoder_block_v2.1} parent=5 // pred_check
      _
    $region38: #{decoder_block_v2.1} parent=5 // pred_check_branch
      %191 = sbr.rel (%p188) target = $region40
    $region39: #{decoder_block_v2.1} parent=5 // pred_region
      %s192 = ssub.s32 %s11, 1
      %p193 = scmp.lt.s32.totalorder %s16, 1
      %s194 = scalar_select %p193, %s16, 1
      %s195 = smul.addr %s194, 2
      %s196 = smul.addr %s195, 8
      %s197 = scalar_lea.vmem %s0, %s196
      %p198 = pneg %p37
      %p199 = pneg %p34
      %p200 = pneg %p58
      %p201 = pneg %p55
      %p202 = pneg %p79
      %p203 = pneg %p76
      %p204 = pneg %p100
      %p205 = pneg %p97
      %p206 = pneg %p121
      %p207 = pneg %p118
      %p208 = pneg %p147
      %p209 = pneg %p144
      %p210 = scmp.lt.s32.totalorder %s16, 1
      %s211 = scalar_select %p210, %s16, 1
      %s212 = smul.addr %s211, 4
      %s213 = smul.addr %s212, 8
      %s214 = scalar_lea.vmem %s5, %s213
      %p215 = scmp.lt.s32.totalorder %s16, 1
      %s216 = scalar_select %p215, %s16, 1
      %s217 = smul.addr %s216, 2
      %s218 = smul.addr %s217, 8
      %s219 = scalar_lea.vmem %s0, %s218
      %p220 = scmp.lt.s32.totalorder %s16, 1
      %s221 = scalar_select %p220, %s16, 1
      %s222 = smul.addr %s221, 4
      %s223 = smul.addr %s222, 8
      %s224 = scalar_lea.vmem %s5, %s223
      %vm225 = vcmask 516096
      %226 = vst.msk [vmem:[#allocation2 + $0x7] sm:$0x1] %vm225, 0.0
      %227 = vst.msk [vmem:[#allocation2 + $0x18] sm:$0x1] %vm225, 0.0
      %228 = vst [vmem:[#allocation3 + $0x7] sm:$0x1] 0.0
      %229 = vst [vmem:[#allocation3 + $0x18] sm:$0x1] 0.0
      %v230 = vld [vmem:[%s219] sm:$0xff]
      %v231 = vld [vmem:[%s219 + $0x8] sm:$0xff]
      %vm232 = vcmask 523264
      %233 = vst.msk [vmem:[#allocation2 + $0x8] sm:$0xff] %vm232, %v230
      %234 = vst.msk [vmem:[#allocation2 + $0x10] sm:$0xff] %vm232, %v231
      %v235 = vld [vmem:[#allocation2 + $0x7] sm:$0xff]
      %v236 = vld [vmem:[#allocation2 + $0xf] sm:$0xff]
      %v237 = vld [vmem:[%s1] sm:$0xff]
      %v238 = vld [vmem:[%s1 + $0x8] sm:$0xff]
      %v239 = vld [vmem:[%s1 + $0x10] sm:$0xff]
      %v240 = vld [vmem:[%s1 + $0x18] sm:$0xff]
      %v241 = vld [vmem:[%s1 + $0x20] sm:$0xff]
      %v242 = vld [vmem:[%s1 + $0x28] sm:$0xff]
      %v243 = vld [vmem:[%s1 + $0x30] sm:$0xff]
      %v244 = vld [vmem:[%s1 + $0x38] sm:$0xff]
      %v245 = vld [vmem:[#allocation2 + $0x8] sm:$0xff]
      %v246 = vld [vmem:[#allocation2 + $0x10] sm:$0xff]
      %s247 = scalar_lea.vmem %s1, 64
      %v248 = vld [vmem:[%s247] sm:$0xff]
      %v249 = vld [vmem:[%s247 + $0x8] sm:$0xff]
      %v250 = vld [vmem:[%s247 + $0x10] sm:$0xff]
      %v251 = vld [vmem:[%s247 + $0x18] sm:$0xff]
      %v252 = vld [vmem:[%s247 + $0x20] sm:$0xff]
      %v253 = vld [vmem:[%s247 + $0x28] sm:$0xff]
      %v254 = vld [vmem:[%s247 + $0x30] sm:$0xff]
      %v255 = vld [vmem:[%s247 + $0x38] sm:$0xff]
      %v257 = vsel %vm232, %v245, 0
      %v260 = vsel %vm232, %v246, 0
      %262 = vmatprep.subr.mxu0 0.0
      %263 = vmatpush1.msra.mxu0 %v248
      %264 = vmatprep.subr.mxu0 0.0
      %265 = vmatpush1.msra.mxu0 %v249
      %266 = vmatprep.subr.mxu0 0.0
      %267 = vmatpush1.msra.mxu0 %v250
      %268 = vmatprep.subr.mxu0 0.0
      %269 = vmatpush1.msra.mxu0 %v251
      %270 = vmatprep.subr.mxu0 0.0
      %271 = vmatpush1.msra.mxu0 %v252
      %272 = vmatprep.subr.mxu0 0.0
      %273 = vmatpush1.msra.mxu0 %v253
      %274 = vmatprep.subr.mxu0 0.0
      %275 = vmatpush1.msra.mxu0 %v254
      %276 = vmatprep.subr.mxu0 0.0
      %277 = vmatpush1.msra.mxu0 %v255
      %278 = vmatprep.subr.mxu0 0.0
      %279 = vmatpush1.msra.mxu0 0.0
      %280 = vmatprep.subr.mxu0 0.0
      %281 = vmatpush1.msra.mxu0 0.0
      %282 = vmatprep.subr.mxu0 0.0
      %283 = vmatpush1.msra.mxu0 0.0
      %284 = vmatprep.subr.mxu0 0.0
      %285 = vmatpush1.msra.mxu0 0.0
      %286 = vmatprep.subr.mxu0 0.0
      %287 = vmatpush1.msra.mxu0 0.0
      %288 = vmatprep.subr.mxu0 0.0
      %289 = vmatpush1.msra.mxu0 0.0
      %290 = vmatprep.subr.mxu0 0.0
      %291 = vmatpush1.msra.mxu0 0.0
      %292 = vmatprep.subr.mxu0 0.0
      %293 = vmatpush1.msra.mxu0 0.0
      %294 = vmatprep.subr.mxu0 0.0
      %295 = vmatpush1.msra.mxu0 0.0
      %296 = vmatprep.subr.mxu0 0.0
      %297 = vmatpush1.msra.mxu0 0.0
      %298 = vmatprep.subr.mxu0 0.0
      %299 = vmatpush1.msra.mxu0 0.0
      %300 = vmatprep.subr.mxu0 0.0
      %301 = vmatpush1.msra.mxu0 0.0
      %302 = vmatprep.subr.mxu0 0.0
      %303 = vmatpush1.msra.mxu0 0.0
      %304 = vmatprep.subr.mxu0 0.0
      %305 = vmatpush1.msra.mxu0 0.0
      %306 = vmatprep.subr.mxu0 0.0
      %307 = vmatpush1.msra.mxu0 0.0
      %308 = vmatprep.subr.mxu0 0.0
      %309 = vmatpush1.msra.mxu0 0.0
      %310 = vmatprep.subr.mxu0 0.0
      %311 = vmatpush1.msra.mxu0 0.0
      %312 = vmatprep.subr.mxu0 0.0
      %313 = vmatpush1.msra.mxu0 0.0
      %314 = vmatprep.subr.mxu0 0.0
      %315 = vmatpush1.msra.mxu0 0.0
      %316 = vmatprep.subr.mxu0 0.0
      %317 = vmatpush1.msra.mxu0 0.0
      %318 = vmatprep.subr.mxu0 0.0
      %319 = vmatpush1.msra.mxu0 0.0
      %320 = vmatprep.subr.mxu0 0.0
      %321 = vmatpush1.msra.mxu0 0.0
      %322 = vmatprep.subr.mxu0 0.0
      %323 = vmatpush1.msra.mxu0 0.0
      %324 = vmatprep.subr.mxu0 0.0
      %325 = vmatpush1.msra.mxu0 0.0
      %326 = vmatprep.mubr.f32.mxu0 0.0
      %327 = vmatmul.mubr.f32.gmra.mrb[0].mxu0 %v257
      %v328 = vpop.f32.mrb[0].mxu0
      %v329 = vadd.f32 0.0, %v328
      %v330 = vpop.f32.mrb[0].mxu0
      %331 = vmatprep.mubr.f32.mxu0 0.0
      %332 = vmatmul.mubr.f32.gmra.mrb[0].mxu0 %v260
      %v333 = vpop.f32.mrb[0].mxu0
      %v334 = vadd.f32 0.0, %v333
      %v335 = vpop.f32.mrb[0].mxu0
      %336 = vdwg.mxu0
      %v338 = vsel %vm232, %v235, 0
      %v341 = vsel %vm232, %v236, 0
      %343 = vmatprep.subr.mxu0 0.0
      %344 = vmatpush1.msra.mxu0 %v237
      %345 = vmatprep.subr.mxu0 0.0
      %346 = vmatpush1.msra.mxu0 %v238
      %347 = vmatprep.subr.mxu0 0.0
      %348 = vmatpush1.msra.mxu0 %v239
      %349 = vmatprep.subr.mxu0 0.0
      %350 = vmatpush1.msra.mxu0 %v240
      %351 = vmatprep.subr.mxu0 0.0
      %352 = vmatpush1.msra.mxu0 %v241
      %353 = vmatprep.subr.mxu0 0.0
      %354 = vmatpush1.msra.mxu0 %v242
      %355 = vmatprep.subr.mxu0 0.0
      %356 = vmatpush1.msra.mxu0 %v243
      %357 = vmatprep.subr.mxu0 0.0
      %358 = vmatpush1.msra.mxu0 %v244
      %359 = vmatprep.subr.mxu0 0.0
      %360 = vmatpush1.msra.mxu0 0.0
      %361 = vmatprep.subr.mxu0 0.0
      %362 = vmatpush1.msra.mxu0 0.0
      %363 = vmatprep.subr.mxu0 0.0
      %364 = vmatpush1.msra.mxu0 0.0
      %365 = vmatprep.subr.mxu0 0.0
      %366 = vmatpush1.msra.mxu0 0.0
      %367 = vmatprep.subr.mxu0 0.0
      %368 = vmatpush1.msra.mxu0 0.0
      %369 = vmatprep.subr.mxu0 0.0
      %370 = vmatpush1.msra.mxu0 0.0
      %371 = vmatprep.subr.mxu0 0.0
      %372 = vmatpush1.msra.mxu0 0.0
      %373 = vmatprep.subr.mxu0 0.0
      %374 = vmatpush1.msra.mxu0 0.0
      %375 = vmatprep.subr.mxu0 0.0
      %376 = vmatpush1.msra.mxu0 0.0
      %377 = vmatprep.subr.mxu0 0.0
      %378 = vmatpush1.msra.mxu0 0.0
      %379 = vmatprep.subr.mxu0 0.0
      %380 = vmatpush1.msra.mxu0 0.0
      %381 = vmatprep.subr.mxu0 0.0
      %382 = vmatpush1.msra.mxu0 0.0
      %383 = vmatprep.subr.mxu0 0.0
      %384 = vmatpush1.msra.mxu0 0.0
      %385 = vmatprep.subr.mxu0 0.0
      %386 = vmatpush1.msra.mxu0 0.0
      %387 = vmatprep.subr.mxu0 0.0
      %388 = vmatpush1.msra.mxu0 0.0
      %389 = vmatprep.subr.mxu0 0.0
      %390 = vmatpush1.msra.mxu0 0.0
      %391 = vmatprep.subr.mxu0 0.0
      %392 = vmatpush1.msra.mxu0 0.0
      %393 = vmatprep.subr.mxu0 0.0
      %394 = vmatpush1.msra.mxu0 0.0
      %395 = vmatprep.subr.mxu0 0.0
      %396 = vmatpush1.msra.mxu0 0.0
      %397 = vmatprep.subr.mxu0 0.0
      %398 = vmatpush1.msra.mxu0 0.0
      %399 = vmatprep.subr.mxu0 0.0
      %400 = vmatpush1.msra.mxu0 0.0
      %401 = vmatprep.subr.mxu0 0.0
      %402 = vmatpush1.msra.mxu0 0.0
      %403 = vmatprep.subr.mxu0 0.0
      %404 = vmatpush1.msra.mxu0 0.0
      %405 = vmatprep.subr.mxu0 0.0
      %406 = vmatpush1.msra.mxu0 0.0
      %407 = vmatprep.mubr.f32.mxu0 0.0
      %408 = vmatmul.mubr.f32.gmra.mrb[0].mxu0 %v338
      %v409 = vpop.f32.mrb[0].mxu0
      %v410 = vadd.f32 %v329, %v409
      %v411 = vpop.f32.mrb[0].mxu0
      %412 = vmatprep.mubr.f32.mxu0 0.0
      %413 = vmatmul.mubr.f32.gmra.mrb[0].mxu0 %v341
      %v414 = vpop.f32.mrb[0].mxu0
      %v415 = vadd.f32 %v334, %v414
      %v416 = vpop.f32.mrb[0].mxu0
      %417 = vdwg.mxu0
      %v418 = vld [vmem:[#allocation2 + $0x9] sm:$0xff]
      %v419 = vld [vmem:[#allocation2 + $0x11] sm:$0xff]
      %s420 = scalar_lea.vmem %s1, 128
      %v421 = vld [vmem:[%s420] sm:$0xff]
      %v422 = vld [vmem:[%s420 + $0x8] sm:$0xff]
      %v423 = vld [vmem:[%s420 + $0x10] sm:$0xff]
      %v424 = vld [vmem:[%s420 + $0x18] sm:$0xff]
      %v425 = vld [vmem:[%s420 + $0x20] sm:$0xff]
      %v426 = vld [vmem:[%s420 + $0x28] sm:$0xff]
      %v427 = vld [vmem:[%s420 + $0x30] sm:$0xff]
      %v428 = vld [vmem:[%s420 + $0x38] sm:$0xff]
      %v430 = vsel %vm232, %v418, 0
      %v433 = vsel %vm232, %v419, 0
      %435 = vmatprep.subr.mxu0 0.0
      %436 = vmatpush1.msra.mxu0 %v421
      %437 = vmatprep.subr.mxu0 0.0
      %438 = vmatpush1.msra.mxu0 %v422
      %439 = vmatprep.subr.mxu0 0.0
      %440 = vmatpush1.msra.mxu0 %v423
      %441 = vmatprep.subr.mxu0 0.0
      %442 = vmatpush1.msra.mxu0 %v424
      %443 = vmatprep.subr.mxu0 0.0
      %444 = vmatpush1.msra.mxu0 %v425
      %445 = vmatprep.subr.mxu0 0.0
      %446 = vmatpush1.msra.mxu0 %v426
      %447 = vmatprep.subr.mxu0 0.0
      %448 = vmatpush1.msra.mxu0 %v427
      %449 = vmatprep.subr.mxu0 0.0
      %450 = vmatpush1.msra.mxu0 %v428
      %451 = vmatprep.subr.mxu0 0.0
      %452 = vmatpush1.msra.mxu0 0.0
      %453 = vmatprep.subr.mxu0 0.0
      %454 = vmatpush1.msra.mxu0 0.0
      %455 = vmatprep.subr.mxu0 0.0
      %456 = vmatpush1.msra.mxu0 0.0
      %457 = vmatprep.subr.mxu0 0.0
      %458 = vmatpush1.msra.mxu0 0.0
      %459 = vmatprep.subr.mxu0 0.0
      %460 = vmatpush1.msra.mxu0 0.0
      %461 = vmatprep.subr.mxu0 0.0
      %462 = vmatpush1.msra.mxu0 0.0
      %463 = vmatprep.subr.mxu0 0.0
      %464 = vmatpush1.msra.mxu0 0.0
      %465 = vmatprep.subr.mxu0 0.0
      %466 = vmatpush1.msra.mxu0 0.0
      %467 = vmatprep.subr.mxu0 0.0
      %468 = vmatpush1.msra.mxu0 0.0
      %469 = vmatprep.subr.mxu0 0.0
      %470 = vmatpush1.msra.mxu0 0.0
      %471 = vmatprep.subr.mxu0 0.0
      %472 = vmatpush1.msra.mxu0 0.0
      %473 = vmatprep.subr.mxu0 0.0
      %474 = vmatpush1.msra.mxu0 0.0
      %475 = vmatprep.subr.mxu0 0.0
      %476 = vmatpush1.msra.mxu0 0.0
      %477 = vmatprep.subr.mxu0 0.0
      %478 = vmatpush1.msra.mxu0 0.0
      %479 = vmatprep.subr.mxu0 0.0
      %480 = vmatpush1.msra.mxu0 0.0
      %481 = vmatprep.subr.mxu0 0.0
      %482 = vmatpush1.msra.mxu0 0.0
      %483 = vmatprep.subr.mxu0 0.0
      %484 = vmatpush1.msra.mxu0 0.0
      %485 = vmatprep.subr.mxu0 0.0
      %486 = vmatpush1.msra.mxu0 0.0
      %487 = vmatprep.subr.mxu0 0.0
      %488 = vmatpush1.msra.mxu0 0.0
      %489 = vmatprep.subr.mxu0 0.0
      %490 = vmatpush1.msra.mxu0 0.0
      %491 = vmatprep.subr.mxu0 0.0
      %492 = vmatpush1.msra.mxu0 0.0
      %493 = vmatprep.subr.mxu0 0.0
      %494 = vmatpush1.msra.mxu0 0.0
      %495 = vmatprep.subr.mxu0 0.0
      %496 = vmatpush1.msra.mxu0 0.0
      %497 = vmatprep.subr.mxu0 0.0
      %498 = vmatpush1.msra.mxu0 0.0
      %499 = vmatprep.mubr.f32.mxu0 0.0
      %500 = vmatmul.mubr.f32.gmra.mrb[0].mxu0 %v430
      %v501 = vpop.f32.mrb[0].mxu0
      %v502 = vadd.f32 0.0, %v501
      %v503 = vpop.f32.mrb[0].mxu0
      %504 = vmatprep.mubr.f32.mxu0 0.0
      %505 = vmatmul.mubr.f32.gmra.mrb[0].mxu0 %v433
      %v506 = vpop.f32.mrb[0].mxu0
      %v507 = vadd.f32 0.0, %v506
      %v508 = vpop.f32.mrb[0].mxu0
      %509 = vdwg.mxu0
      %v510 = vadd.f32 %v410, %v502
      %v511 = vadd.f32 %v415, %v507
      %v512 = vld [vmem:[%s2] sm:$0x1]
      %v514 = vlaneseq
      %v515 = vshrl.u32 %v514, 7
      %v516 = vsub.s32 0, %v515
      %v517 = vrot.slane %v512, %v516
      %v519 = vadd.f32 %v510, %v517
      %v520 = vadd.f32 %v511, %v517
      %v521 = vmax.f32 %v519, 0.0
      %v522 = vmax.f32 %v520, 0.0
      %523 = vst [vmem:[#allocation3 + $0x8] sm:$0xff] %v521
      %524 = vst [vmem:[#allocation3 + $0x10] sm:$0xff] %v522
      %v525 = vld [vmem:[#allocation3 + $0x7] sm:$0xff]
      %v526 = vld [vmem:[#allocation3 + $0xf] sm:$0xff]
      %v527 = vld [vmem:[%s3] sm:$0xff]
      %v528 = vld [vmem:[%s3 + $0x8] sm:$0xff]
      %v529 = vld [vmem:[%s3 + $0x10] sm:$0xff]
      %v530 = vld [vmem:[%s3 + $0x18] sm:$0xff]
      %v531 = vld [vmem:[%s3 + $0x20] sm:$0xff]
      %v532 = vld [vmem:[%s3 + $0x28] sm:$0xff]
      %v533 = vld [vmem:[%s3 + $0x30] sm:$0xff]
      %v534 = vld [vmem:[%s3 + $0x38] sm:$0xff]
      %v535 = vld [vmem:[%s3 + $0x40] sm:$0xff]
      %v536 = vld [vmem:[%s3 + $0x48] sm:$0xff]
      %v537 = vld [vmem:[%s3 + $0x50] sm:$0xff]
      %v538 = vld [vmem:[%s3 + $0x58] sm:$0xff]
      %v539 = vld [vmem:[%s3 + $0x60] sm:$0xff]
      %v540 = vld [vmem:[%s3 + $0x68] sm:$0xff]
      %v541 = vld [vmem:[%s3 + $0x70] sm:$0xff]
      %v542 = vld [vmem:[%s3 + $0x78] sm:$0xff]
      %v543 = vld [vmem:[%s3 + $0x80] sm:$0xff]
      %v544 = vld [vmem:[%s3 + $0x88] sm:$0xff]
      %v545 = vld [vmem:[%s3 + $0x90] sm:$0xff]
      %v546 = vld [vmem:[%s3 + $0x98] sm:$0xff]
      %v547 = vld [vmem:[%s3 + $0xa0] sm:$0xff]
      %v548 = vld [vmem:[%s3 + $0xa8] sm:$0xff]
      %v549 = vld [vmem:[%s3 + $0xb0] sm:$0xff]
      %v550 = vld [vmem:[%s3 + $0xb8] sm:$0xff]
      %v551 = vld [vmem:[%s3 + $0xc0] sm:$0xff]
      %v552 = vld [vmem:[%s3 + $0xc8] sm:$0xff]
      %v553 = vld [vmem:[%s3 + $0xd0] sm:$0xff]
      %v554 = vld [vmem:[%s3 + $0xd8] sm:$0xff]
      %v555 = vld [vmem:[%s3 + $0xe0] sm:$0xff]
      %v556 = vld [vmem:[%s3 + $0xe8] sm:$0xff]
      %v557 = vld [vmem:[%s3 + $0xf0] sm:$0xff]
      %v558 = vld [vmem:[%s3 + $0xf8] sm:$0xff]
      %v559 = vld [vmem:[#allocation3 + $0x8] sm:$0xff]
      %v560 = vld [vmem:[#allocation3 + $0x10] sm:$0xff]
      %s561 = scalar_lea.vmem %s3, 256
      %v562 = vld [vmem:[%s561] sm:$0xff]
      %v563 = vld [vmem:[%s561 + $0x8] sm:$0xff]
      %v564 = vld [vmem:[%s561 + $0x10] sm:$0xff]
      %v565 = vld [vmem:[%s561 + $0x18] sm:$0xff]
      %v566 = vld [vmem:[%s561 + $0x20] sm:$0xff]
      %v567 = vld [vmem:[%s561 + $0x28] sm:$0xff]
      %v568 = vld [vmem:[%s561 + $0x30] sm:$0xff]
      %v569 = vld [vmem:[%s561 + $0x38] sm:$0xff]
      %v570 = vld [vmem:[%s561 + $0x40] sm:$0xff]
      %v571 = vld [vmem:[%s561 + $0x48] sm:$0xff]
      %v572 = vld [vmem:[%s561 + $0x50] sm:$0xff]
      %v573 = vld [vmem:[%s561 + $0x58] sm:$0xff]
      %v574 = vld [vmem:[%s561 + $0x60] sm:$0xff]
      %v575 = vld [vmem:[%s561 + $0x68] sm:$0xff]
      %v576 = vld [vmem:[%s561 + $0x70] sm:$0xff]
      %v577 = vld [vmem:[%s561 + $0x78] sm:$0xff]
      %v578 = vld [vmem:[%s561 + $0x80] sm:$0xff]
      %v579 = vld [vmem:[%s561 + $0x88] sm:$0xff]
      %v580 = vld [vmem:[%s561 + $0x90] sm:$0xff]
      %v581 = vld [vmem:[%s561 + $0x98] sm:$0xff]
      %v582 = vld [vmem:[%s561 + $0xa0] sm:$0xff]
      %v583 = vld [vmem:[%s561 + $0xa8] sm:$0xff]
      %v584 = vld [vmem:[%s561 + $0xb0] sm:$0xff]
      %v585 = vld [vmem:[%s561 + $0xb8] sm:$0xff]
      %v586 = vld [vmem:[%s561 + $0xc0] sm:$0xff]
      %v587 = vld [vmem:[%s561 + $0xc8] sm:$0xff]
      %v588 = vld [vmem:[%s561 + $0xd0] sm:$0xff]
      %v589 = vld [vmem:[%s561 + $0xd8] sm:$0xff]
      %v590 = vld [vmem:[%s561 + $0xe0] sm:$0xff]
      %v591 = vld [vmem:[%s561 + $0xe8] sm:$0xff]
      %v592 = vld [vmem:[%s561 + $0xf0] sm:$0xff]
      %v593 = vld [vmem:[%s561 + $0xf8] sm:$0xff]
      %594 = vmatprep.subr.mxu0 %v563
      %595 = vmatpush1.msra.mxu0 %v562
      %596 = vmatprep.subr.mxu0 %v565
      %597 = vmatpush1.msra.mxu0 %v564
      %598 = vmatprep.subr.mxu0 %v567
      %599 = vmatpush1.msra.mxu0 %v566
      %600 = vmatprep.subr.mxu0 %v569
      %601 = vmatpush1.msra.mxu0 %v568
      %602 = vmatprep.subr.mxu0 %v571
      %603 = vmatpush1.msra.mxu0 %v570
      %604 = vmatprep.subr.mxu0 %v573
      %605 = vmatpush1.msra.mxu0 %v572
      %606 = vmatprep.subr.mxu0 %v575
      %607 = vmatpush1.msra.mxu0 %v574
      %608 = vmatprep.subr.mxu0 %v577
      %609 = vmatpush1.msra.mxu0 %v576
      %610 = vmatprep.subr.mxu0 %v579
      %611 = vmatpush1.msra.mxu0 %v578
      %612 = vmatprep.subr.mxu0 %v581
      %613 = vmatpush1.msra.mxu0 %v580
      %614 = vmatprep.subr.mxu0 %v583
      %615 = vmatpush1.msra.mxu0 %v582
      %616 = vmatprep.subr.mxu0 %v585
      %617 = vmatpush1.msra.mxu0 %v584
      %618 = vmatprep.subr.mxu0 %v587
      %619 = vmatpush1.msra.mxu0 %v586
      %620 = vmatprep.subr.mxu0 %v589
      %621 = vmatpush1.msra.mxu0 %v588
      %622 = vmatprep.subr.mxu0 %v591
      %623 = vmatpush1.msra.mxu0 %v590
      %624 = vmatprep.subr.mxu0 %v593
      %625 = vmatpush1.msra.mxu0 %v592
      %626 = vmatprep.subr.mxu0 0.0
      %627 = vmatpush1.msra.mxu0 0.0
      %628 = vmatprep.subr.mxu0 0.0
      %629 = vmatpush1.msra.mxu0 0.0
      %630 = vmatprep.subr.mxu0 0.0
      %631 = vmatpush1.msra.mxu0 0.0
      %632 = vmatprep.subr.mxu0 0.0
      %633 = vmatpush1.msra.mxu0 0.0
      %634 = vmatprep.subr.mxu0 0.0
      %635 = vmatpush1.msra.mxu0 0.0
      %636 = vmatprep.subr.mxu0 0.0
      %637 = vmatpush1.msra.mxu0 0.0
      %638 = vmatprep.subr.mxu0 0.0
      %639 = vmatpush1.msra.mxu0 0.0
      %640 = vmatprep.subr.mxu0 0.0
      %641 = vmatpush1.msra.mxu0 0.0
      %642 = vmatprep.subr.mxu0 0.0
      %643 = vmatpush1.msra.mxu0 0.0
      %644 = vmatprep.subr.mxu0 0.0
      %645 = vmatpush1.msra.mxu0 0.0
      %646 = vmatprep.subr.mxu0 0.0
      %647 = vmatpush1.msra.mxu0 0.0
      %648 = vmatprep.subr.mxu0 0.0
      %649 = vmatpush1.msra.mxu0 0.0
      %650 = vmatprep.subr.mxu0 0.0
      %651 = vmatpush1.msra.mxu0 0.0
      %652 = vmatprep.subr.mxu0 0.0
      %653 = vmatpush1.msra.mxu0 0.0
      %654 = vmatprep.subr.mxu0 0.0
      %655 = vmatpush1.msra.mxu0 0.0
      %656 = vmatprep.subr.mxu0 0.0
      %657 = vmatpush1.msra.mxu0 0.0
      %658 = vmatprep.mubr.f32.mxu0 0.0
      %659 = vmatmul.mubr.f32.gmra.mrb[0].mxu0 %v559
      %v660 = vpop.f32.mrb[0].mxu0
      %v661 = vadd.f32 0.0, %v660
      %v662 = vpop.f32.mrb[0].mxu0
      %v663 = vadd.f32 0.0, %v662
      %664 = vmatprep.mubr.f32.mxu0 0.0
      %665 = vmatmul.mubr.f32.gmra.mrb[0].mxu0 %v560
      %v666 = vpop.f32.mrb[0].mxu0
      %v667 = vadd.f32 0.0, %v666
      %v668 = vpop.f32.mrb[0].mxu0
      %v669 = vadd.f32 0.0, %v668
      %670 = vdwg.mxu0
      %671 = vmatprep.subr.mxu0 %v528
      %672 = vmatpush1.msra.mxu0 %v527
      %673 = vmatprep.subr.mxu0 %v530
      %674 = vmatpush1.msra.mxu0 %v529
      %675 = vmatprep.subr.mxu0 %v532
      %676 = vmatpush1.msra.mxu0 %v531
      %677 = vmatprep.subr.mxu0 %v534
      %678 = vmatpush1.msra.mxu0 %v533
      %679 = vmatprep.subr.mxu0 %v536
      %680 = vmatpush1.msra.mxu0 %v535
      %681 = vmatprep.subr.mxu0 %v538
      %682 = vmatpush1.msra.mxu0 %v537
      %683 = vmatprep.subr.mxu0 %v540
      %684 = vmatpush1.msra.mxu0 %v539
      %685 = vmatprep.subr.mxu0 %v542
      %686 = vmatpush1.msra.mxu0 %v541
      %687 = vmatprep.subr.mxu0 %v544
      %688 = vmatpush1.msra.mxu0 %v543
      %689 = vmatprep.subr.mxu0 %v546
      %690 = vmatpush1.msra.mxu0 %v545
      %691 = vmatprep.subr.mxu0 %v548
      %692 = vmatpush1.msra.mxu0 %v547
      %693 = vmatprep.subr.mxu0 %v550
      %694 = vmatpush1.msra.mxu0 %v549
      %695 = vmatprep.subr.mxu0 %v552
      %696 = vmatpush1.msra.mxu0 %v551
      %697 = vmatprep.subr.mxu0 %v554
      %698 = vmatpush1.msra.mxu0 %v553
      %699 = vmatprep.subr.mxu0 %v556
      %700 = vmatpush1.msra.mxu0 %v555
      %701 = vmatprep.subr.mxu0 %v558
      %702 = vmatpush1.msra.mxu0 %v557
      %703 = vmatprep.subr.mxu0 0.0
      %704 = vmatpush1.msra.mxu0 0.0
      %705 = vmatprep.subr.mxu0 0.0
      %706 = vmatpush1.msra.mxu0 0.0
      %707 = vmatprep.subr.mxu0 0.0
      %708 = vmatpush1.msra.mxu0 0.0
      %709 = vmatprep.subr.mxu0 0.0
      %710 = vmatpush1.msra.mxu0 0.0
      %711 = vmatprep.subr.mxu0 0.0
      %712 = vmatpush1.msra.mxu0 0.0
      %713 = vmatprep.subr.mxu0 0.0
      %714 = vmatpush1.msra.mxu0 0.0
      %715 = vmatprep.subr.mxu0 0.0
      %716 = vmatpush1.msra.mxu0 0.0
      %717 = vmatprep.subr.mxu0 0.0
      %718 = vmatpush1.msra.mxu0 0.0
      %719 = vmatprep.subr.mxu0 0.0
      %720 = vmatpush1.msra.mxu0 0.0
      %721 = vmatprep.subr.mxu0 0.0
      %722 = vmatpush1.msra.mxu0 0.0
      %723 = vmatprep.subr.mxu0 0.0
      %724 = vmatpush1.msra.mxu0 0.0
      %725 = vmatprep.subr.mxu0 0.0
      %726 = vmatpush1.msra.mxu0 0.0
      %727 = vmatprep.subr.mxu0 0.0
      %728 = vmatpush1.msra.mxu0 0.0
      %729 = vmatprep.subr.mxu0 0.0
      %730 = vmatpush1.msra.mxu0 0.0
      %731 = vmatprep.subr.mxu0 0.0
      %732 = vmatpush1.msra.mxu0 0.0
      %733 = vmatprep.subr.mxu0 0.0
      %734 = vmatpush1.msra.mxu0 0.0
      %735 = vmatprep.mubr.f32.mxu0 0.0
      %736 = vmatmul.mubr.f32.gmra.mrb[0].mxu0 %v525
      %v737 = vpop.f32.mrb[0].mxu0
      %v738 = vadd.f32 %v661, %v737
      %v739 = vpop.f32.mrb[0].mxu0
      %v740 = vadd.f32 %v663, %v739
      %741 = vmatprep.mubr.f32.mxu0 0.0
      %742 = vmatmul.mubr.f32.gmra.mrb[0].mxu0 %v526
      %v743 = vpop.f32.mrb[0].mxu0
      %v744 = vadd.f32 %v667, %v743
      %v745 = vpop.f32.mrb[0].mxu0
      %v746 = vadd.f32 %v669, %v745
      %747 = vdwg.mxu0
      %v748 = vld [vmem:[#allocation3 + $0x9] sm:$0xff]
      %v749 = vld [vmem:[#allocation3 + $0x11] sm:$0xff]
      %s750 = scalar_lea.vmem %s3, 512
      %v751 = vld [vmem:[%s750] sm:$0xff]
      %v752 = vld [vmem:[%s750 + $0x8] sm:$0xff]
      %v753 = vld [vmem:[%s750 + $0x10] sm:$0xff]
      %v754 = vld [vmem:[%s750 + $0x18] sm:$0xff]
      %v755 = vld [vmem:[%s750 + $0x20] sm:$0xff]
      %v756 = vld [vmem:[%s750 + $0x28] sm:$0xff]
      %v757 = vld [vmem:[%s750 + $0x30] sm:$0xff]
      %v758 = vld [vmem:[%s750 + $0x38] sm:$0xff]
      %v759 = vld [vmem:[%s750 + $0x40] sm:$0xff]
      %v760 = vld [vmem:[%s750 + $0x48] sm:$0xff]
      %v761 = vld [vmem:[%s750 + $0x50] sm:$0xff]
      %v762 = vld [vmem:[%s750 + $0x58] sm:$0xff]
      %v763 = vld [vmem:[%s750 + $0x60] sm:$0xff]
      %v764 = vld [vmem:[%s750 + $0x68] sm:$0xff]
      %v765 = vld [vmem:[%s750 + $0x70] sm:$0xff]
      %v766 = vld [vmem:[%s750 + $0x78] sm:$0xff]
      %v767 = vld [vmem:[%s750 + $0x80] sm:$0xff]
      %v768 = vld [vmem:[%s750 + $0x88] sm:$0xff]
      %v769 = vld [vmem:[%s750 + $0x90] sm:$0xff]
      %v770 = vld [vmem:[%s750 + $0x98] sm:$0xff]
      %v771 = vld [vmem:[%s750 + $0xa0] sm:$0xff]
      %v772 = vld [vmem:[%s750 + $0xa8] sm:$0xff]
      %v773 = vld [vmem:[%s750 + $0xb0] sm:$0xff]
      %v774 = vld [vmem:[%s750 + $0xb8] sm:$0xff]
      %v775 = vld [vmem:[%s750 + $0xc0] sm:$0xff]
      %v776 = vld [vmem:[%s750 + $0xc8] sm:$0xff]
      %v777 = vld [vmem:[%s750 + $0xd0] sm:$0xff]
      %v778 = vld [vmem:[%s750 + $0xd8] sm:$0xff]
      %v779 = vld [vmem:[%s750 + $0xe0] sm:$0xff]
      %v780 = vld [vmem:[%s750 + $0xe8] sm:$0xff]
      %v781 = vld [vmem:[%s750 + $0xf0] sm:$0xff]
      %v782 = vld [vmem:[%s750 + $0xf8] sm:$0xff]
      %783 = vmatprep.subr.mxu0 %v752
      %784 = vmatpush1.msra.mxu0 %v751
      %785 = vmatprep.subr.mxu0 %v754
      %786 = vmatpush1.msra.mxu0 %v753
      %787 = vmatprep.subr.mxu0 %v756
      %788 = vmatpush1.msra.mxu0 %v755
      %789 = vmatprep.subr.mxu0 %v758
      %790 = vmatpush1.msra.mxu0 %v757
      %791 = vmatprep.subr.mxu0 %v760
      %792 = vmatpush1.msra.mxu0 %v759
      %793 = vmatprep.subr.mxu0 %v762
      %794 = vmatpush1.msra.mxu0 %v761
      %795 = vmatprep.subr.mxu0 %v764
      %796 = vmatpush1.msra.mxu0 %v763
      %797 = vmatprep.subr.mxu0 %v766
      %798 = vmatpush1.msra.mxu0 %v765
      %799 = vmatprep.subr.mxu0 %v768
      %800 = vmatpush1.msra.mxu0 %v767
      %801 = vmatprep.subr.mxu0 %v770
      %802 = vmatpush1.msra.mxu0 %v769
      %803 = vmatprep.subr.mxu0 %v772
      %804 = vmatpush1.msra.mxu0 %v771
      %805 = vmatprep.subr.mxu0 %v774
      %806 = vmatpush1.msra.mxu0 %v773
      %807 = vmatprep.subr.mxu0 %v776
      %808 = vmatpush1.msra.mxu0 %v775
      %809 = vmatprep.subr.mxu0 %v778
      %810 = vmatpush1.msra.mxu0 %v777
      %811 = vmatprep.subr.mxu0 %v780
      %812 = vmatpush1.msra.mxu0 %v779
      %813 = vmatprep.subr.mxu0 %v782
      %814 = vmatpush1.msra.mxu0 %v781
      %815 = vmatprep.subr.mxu0 0.0
      %816 = vmatpush1.msra.mxu0 0.0
      %817 = vmatprep.subr.mxu0 0.0
      %818 = vmatpush1.msra.mxu0 0.0
      %819 = vmatprep.subr.mxu0 0.0
      %820 = vmatpush1.msra.mxu0 0.0
      %821 = vmatprep.subr.mxu0 0.0
      %822 = vmatpush1.msra.mxu0 0.0
      %823 = vmatprep.subr.mxu0 0.0
      %824 = vmatpush1.msra.mxu0 0.0
      %825 = vmatprep.subr.mxu0 0.0
      %826 = vmatpush1.msra.mxu0 0.0
      %827 = vmatprep.subr.mxu0 0.0
      %828 = vmatpush1.msra.mxu0 0.0
      %829 = vmatprep.subr.mxu0 0.0
      %830 = vmatpush1.msra.mxu0 0.0
      %831 = vmatprep.subr.mxu0 0.0
      %832 = vmatpush1.msra.mxu0 0.0
      %833 = vmatprep.subr.mxu0 0.0
      %834 = vmatpush1.msra.mxu0 0.0
      %835 = vmatprep.subr.mxu0 0.0
      %836 = vmatpush1.msra.mxu0 0.0
      %837 = vmatprep.subr.mxu0 0.0
      %838 = vmatpush1.msra.mxu0 0.0
      %839 = vmatprep.subr.mxu0 0.0
      %840 = vmatpush1.msra.mxu0 0.0
      %841 = vmatprep.subr.mxu0 0.0
      %842 = vmatpush1.msra.mxu0 0.0
      %843 = vmatprep.subr.mxu0 0.0
      %844 = vmatpush1.msra.mxu0 0.0
      %845 = vmatprep.subr.mxu0 0.0
      %846 = vmatpush1.msra.mxu0 0.0
      %847 = vmatprep.mubr.f32.mxu0 0.0
      %848 = vmatmul.mubr.f32.gmra.mrb[0].mxu0 %v748
      %v849 = vpop.f32.mrb[0].mxu0
      %v850 = vadd.f32 0.0, %v849
      %v851 = vpop.f32.mrb[0].mxu0
      %v852 = vadd.f32 0.0, %v851
      %853 = vmatprep.mubr.f32.mxu0 0.0
      %854 = vmatmul.mubr.f32.gmra.mrb[0].mxu0 %v749
      %v855 = vpop.f32.mrb[0].mxu0
      %v856 = vadd.f32 0.0, %v855
      %v857 = vpop.f32.mrb[0].mxu0
      %v858 = vadd.f32 0.0, %v857
      %859 = vdwg.mxu0
      %v860 = vadd.f32 %v738, %v850
      %v861 = vadd.f32 %v740, %v852
      %v862 = vadd.f32 %v744, %v856
      %v863 = vadd.f32 %v746, %v858
      %v864 = vld [vmem:[%s4] sm:$0x3]
      %v866 = vlaneseq
      %v867 = vshrl.u32 %v866, 7
      %v868 = vsub.s32 0, %v867
      %v869 = vrot.slane %v864, %v868
      %v870 = vlaneseq
      %v871 = vshrl.u32 %v870, 7
      %v872 = vsub.s32 1, %v871
      %v873 = vrot.slane %v864, %v872
      %v876 = vadd.f32 %v860, %v869
      %v877 = vadd.f32 %v861, %v873
      %v878 = vadd.f32 %v862, %v869
      %v879 = vadd.f32 %v863, %v873
      %v880 = vmax.f32 %v876, 0.0
      %v881 = vmax.f32 %v877, 0.0
      %v882 = vmax.f32 %v878, 0.0
      %v883 = vmax.f32 %v879, 0.0
      %884 = vst [vmem:[%s224] sm:$0xff] %v880
      %885 = vst [vmem:[%s224 + $0x8] sm:$0xff] %v881
      %886 = vst [vmem:[%s224 + $0x10] sm:$0xff] %v882
      %887 = vst [vmem:[%s224 + $0x18] sm:$0xff] %v883
      %p888 = scmp.lt.s32.totalorder %s16, 1
      %s889 = scalar_select %p888, %s16, 1
      %s890 = smul.addr %s889, 4
      %s891 = smul.addr %s890, 8
      %s892 = scalar_lea.vmem %s5, %s891
      // Predicated region
      $region41: #{decoder_block_v2.1} parent=39 // pred_check
        %p893 = pneg %p144
      $region42: #{decoder_block_v2.1} parent=39 // pred_check_branch
        %895 = sbr.rel (%p893) target = $region44
      $region43: #{decoder_block_v2.1} parent=39 // pred_region
        _
      $region44: #{decoder_block_v2.1} parent=39 // pred_fallthru
        _
    $region40: #{decoder_block_v2.1} parent=5 // pred_fallthru
      _
    %p896 = scmp.le.s32.totalorder 2, %s11
    // Predicated region
    $region45: #{decoder_block_v2.1} parent=5 // pred_check
      %p897 = pneg %p896
    $region46: #{decoder_block_v2.1} parent=5 // pred_check_branch
      %899 = sbr.rel (%p897) target = $region48
    $region47: #{decoder_block_v2.1} parent=5 // pred_region
      %s900 = ssub.s32 %s11, 2
      // Predicated region
      $region49: #{decoder_block_v2.1} parent=47 // pred_check
        %p901 = pneg %p150
      $region50: #{decoder_block_v2.1} parent=47 // pred_check_branch
        %903 = sbr.rel (%p901) target = $region52
      $region51: #{decoder_block_v2.1} parent=47 // pred_region
        %p904 = scmp.lt.s32.totalorder %s17, 1
        %s905 = scalar_select %p904, %s17, 1
        %s906 = smul.addr %s905, 4
        %s907 = smul.addr %s906, 8
        %s908 = scalar_lea.vmem %s5, %s907
      $region52: #{decoder_block_v2.1} parent=47 // pred_fallthru
        _
    $region48: #{decoder_block_v2.1} parent=5 // pred_fallthru
      _
  $region6: #{decoder_block_v2.1} parent=0 // loop_footer
    %s15 = sadd.s32 1, %s11
  $region7: #{decoder_block_v2.1} parent=0 // loop_footer_branch
    %10 = sbr.rel target = $region3
  $region8: #{decoder_block_v2.1} parent=0 // loop_exit
    _

</llo_original>
